<compile_context>
chip_gen: v6e
topology: v6e:2x2x1
jax: 0.10.0
libtpu: 0.0.40
codegen_flags: <defaults>
</compile_context>

<pallas_src>
import math

import jax
import jax.numpy as jnp
from jax.experimental import pallas as pl
from jax.experimental.pallas import tpu as pltpu

P_PACK = 16  # query points packed per lane-row (16 * c0_pad(=8k) lanes stay 128-dense)


def _round_up(x, m):
    return ((x + m - 1) // m) * m


def _plan_tiles(M, tile_m_target=512):
    """Pick tile_m (multiple of P_PACK*8 so packed rows stay (8,128)-tiled).

    Prefer the smallest total padding; among ties prefer >=2 grid steps (v7x has
    two TensorCores) and then the fewest steps (amortize ~0.35us/step overhead)."""
    row_align = P_PACK * 8  # 128
    max_tile = _round_up(min(tile_m_target, max(M, 1)), row_align)
    best = None
    for tile_m in range(row_align, max_tile + 1, row_align):
        m_pad = _round_up(M, tile_m)
        steps = m_pad // tile_m
        key = (m_pad, 0 if steps >= 2 else 1, steps)
        if best is None or key < best[0]:
            best = (key, tile_m, m_pad)
    return best[1], best[2]


# ----------------------------------------------------------------------------
# Pallas kernel: fused multi-scale shared MLP (conv+BN folded+ReLU) + pooling
# ----------------------------------------------------------------------------
def _make_fused_mlp_pool_kernel(nsamples, layer_counts, rows, out_offsets, out_widths,
                                pool_method):
    n_scales = len(nsamples)

    def kernel(*refs):
        x_refs = refs[:n_scales]      # per scale: (ns, rows, P_PACK*c0_pad) bf16
        w_refs = refs[n_scales:-1]    # flattened per-scale block-diagonal weights, bf16
        o_ref = refs[-1]              # (rows, sum_s P_PACK*c_out_pad_s) f32

        w_off = 0
        for s in range(n_scales):
            ns = nsamples[s]
            nl = layer_counts[s]
            x = x_refs[s][...]                              # (ns, rows, lanes) bf16
            # contiguous leading-dim merge (rows % 8 == 0): free, no relayout
            h = x.reshape(ns * rows, x.shape[-1])
            for li in range(nl):
                z = jnp.dot(h, w_refs[w_off + li][...],
                            preferred_element_type=jnp.float32)   # MXU, f32 acc
                z = jnp.maximum(z, 0.0)                            # ReLU in f32
                # bf16 intermediates halve the VMEM slab and keep the MXU on the
                # bf16 path; with packed K/N the MXU is no longer starved.
                h = z.astype(jnp.bfloat16) if li + 1 < nl else z
            w_off += nl

            # neighbor-major pooling: unrolled elementwise VPU max/add across the
            # ns row-slabs (no sublane-interleaved reshape, no XLU reduce).
            pooled = h[0:rows, :]
            for n in range(1, ns):
                slab = h[n * rows:(n + 1) * rows, :]
                if pool_method == 'max_pool':
                    pooled = jnp.maximum(pooled, slab)
                else:                                      # avg_pool
                    pooled = pooled + slab
            if pool_method == 'avg_pool':
                pooled = pooled * (1.0 / ns)

            off, width = out_offsets[s], out_widths[s]
            # 128-aligned static lane slice, width a multiple of 128 -> unmasked vst
            o_ref[:, off:off + width] = pooled.astype(o_ref.dtype)

    return kernel


def fused_mlp_pool_packed(packed_xs, packed_ws, layer_counts, c_outs, c_out_pads,
                          M, tile_m, m_pad, pool_method):
    n_scales = len(packed_xs)
    nsamples = tuple(int(x.shape[0]) for x in packed_xs)
    rows = tile_m // P_PACK
    widths = tuple(int(P_PACK * c) for c in c_out_pads)
    offsets = []
    acc = 0
    for w in widths:
        offsets.append(acc)
        acc += w
    offsets = tuple(offsets)
    total_width = acc
    grid = (m_pad // tile_m,)

    in_specs = []
    for x in packed_xs:
        shp = (int(x.shape[0]), rows, int(x.shape[2]))
        in_specs.append(pl.BlockSpec(shp, lambda i: (0, i, 0)))
    for w in packed_ws:
        in_specs.append(pl.BlockSpec(tuple(int(d) for d in w.shape), lambda i: (0, 0)))
    out_specs = pl.BlockSpec((rows, total_width), lambda i: (i, 0))

    # Advisory cost estimate so XLA schedules the gather/ball-query glue around us.
    flops = 0
    bytes_acc = 0
    wi = 0
    for s, ns in enumerate(nsamples):
        for _ in range(layer_counts[s]):
            w = packed_ws[wi]
            flops += 2 * (m_pad // P_PACK) * ns * int(w.shape[0]) * int(w.shape[1])
            bytes_acc += int(w.size) * 2
            wi += 1
        bytes_acc += int(packed_xs[s].size) * 2
    bytes_acc += (m_pad // P_PACK) * total_width * 4

    out = pl.pallas_call(
        _make_fused_mlp_pool_kernel(nsamples, tuple(layer_counts), rows,
                                    offsets, widths, pool_method),
        out_shape=jax.ShapeDtypeStruct((m_pad // P_PACK, total_width), jnp.float32),
        grid_spec=pltpu.PrefetchScalarGridSpec(
            num_scalar_prefetch=0,
            grid=grid,
            in_specs=in_specs,
            out_specs=out_specs),
        compiler_params=pltpu.CompilerParams(
            dimension_semantics=("parallel",),
            vmem_limit_bytes=32 * 1024 * 1024),
        cost_estimate=pl.CostEstimate(
            flops=int(flops), transcendentals=0, bytes_accessed=int(bytes_acc)),
    )(*packed_xs, *packed_ws)

    # Unpack each scale: (m_pad/P, P*c_out_pad) -> (m_pad, c_out_pad) is a free
    # row-major reshape; slice off padded rows/channels and concat (tiny copy).
    feats = []
    for s in range(n_scales):
        slab = out[:, offsets[s]:offsets[s] + widths[s]]
        feats.append(slab.reshape(m_pad, c_out_pads[s])[:M, :c_outs[s]])
    return feats[0] if n_scales == 1 else jnp.concatenate(feats, axis=1)


# ----------------------------------------------------------------------------
# Weights: fold eval-mode BN into 1x1 conv, pad channels to x8, 16-way block-diag
# ----------------------------------------------------------------------------
def _prepare_packed_weights(weights_list, c0_pad):
    packed, layer_counts, c_outs, c_out_pads = [], [], [], []
    eye = jnp.eye(P_PACK, dtype=jnp.float32)
    for wlist in weights_list:
        layer_counts.append(len(wlist))
        c_in_pad = c0_pad
        n = n_pad = None
        for w in wlist:
            k, n = int(w.shape[0]), int(w.shape[1])
            n_pad = _round_up(n, 8)
            wp = jnp.zeros((c_in_pad, n_pad), jnp.float32).at[:k, :n].set(w)
            # 16-way block-diagonal: point p's lane block only mixes with itself.
            bd = jnp.einsum('pq,kn->pkqn', eye, wp).reshape(P_PACK * c_in_pad,
                                                            P_PACK * n_pad)
            packed.append(bd.astype(jnp.bfloat16))
            c_in_pad = n_pad
        c_outs.append(n)
        c_out_pads.append(n_pad)
    return packed, tuple(layer_counts), c_outs, c_out_pads


# ----------------------------------------------------------------------------
# Ball query + grouping -- plain JAX glue (data-dependent gather)
# ----------------------------------------------------------------------------
def ball_query(xyz, xyz_batch_cnt, new_xyz, new_xyz_batch_cnt, radius, nsample):
    # TODO(synk): dense O(M*N) query + sort; replace with a tiled/grid-hashed kernel.
    N = xyz.shape[0]
    M = new_xyz.shape[0]
    bid_xyz = jnp.searchsorted(jnp.cumsum(xyz_batch_cnt), jnp.arange(N), side='right')
    bid_new = jnp.searchsorted(jnp.cumsum(new_xyz_batch_cnt), jnp.arange(M), side='right')

    d2 = jnp.sum((new_xyz[:, None, :] - xyz[None, :, :]) ** 2, axis=-1)   # (M, N)
    valid = (d2 < radius * radius) & (bid_new[:, None] == bid_xyz[None, :])
    cnt = jnp.sum(valid, axis=1)

    # First `nsample` valid neighbor indices, in point order (as the CUDA kernel does).
    key = jnp.where(valid, jnp.arange(N)[None, :], N)
    order = jnp.sort(key, axis=1)[:, :nsample]
    first = order[:, :1]
    k_ar = jnp.arange(nsample)[None, :]
    idx = jnp.where(k_ar < cnt[:, None], order, first)     # dup first neighbor
    empty = cnt == 0
    idx = jnp.where(empty[:, None], 0, idx)
    return idx, empty


def group_features(idx, empty, xyz, new_xyz, features, use_xyz=True):
    """f32 (M, ns, c0) grouped tensor (used for the pure-JAX reference)."""
    grouped_xyz = xyz[idx] - new_xyz[:, None, :]
    grouped_xyz = jnp.where(empty[:, None, None], 0.0, grouped_xyz)
    grouped_feat = jnp.where(empty[:, None, None], 0.0, features[idx])
    if use_xyz:
        return jnp.concatenate([grouped_xyz, grouped_feat], axis=-1)
    return grouped_feat


def group_features_packed(idx, empty, xyz, new_xyz, features, use_xyz, m_pad, c0_pad):
    """bf16 neighbor-major lane-packed slab (ns, m_pad/P, P*c0_pad) for the kernel.

    Cast to bf16 at gather time, then one transpose+pad copy (XLA fuses the pad),
    then a free row-major reshape to pack P_PACK query points per lane-row."""
    ns = int(idx.shape[1])
    M = int(idx.shape[0])
    rel = (xyz[idx] - new_xyz[:, None, :]).astype(jnp.bfloat16)    # (M, ns, 3)
    gf = features.astype(jnp.bfloat16)[idx]                        # (M, ns, C)
    g = jnp.concatenate([rel, gf], axis=-1) if use_xyz else gf     # (M, ns, c0)
    g = jnp.where(empty[:, None, None], 0.0, g).astype(jnp.bfloat16)
    c0 = int(g.shape[-1])
    g = jnp.transpose(g, (1, 0, 2))                                # (ns, M, c0)
    g = jnp.pad(g, ((0, 0), (0, m_pad - M), (0, c0_pad - c0)))
    return g.reshape(ns, m_pad // P_PACK, P_PACK * c0_pad)


def query_and_group(xyz, xyz_batch_cnt, new_xyz, new_xyz_batch_cnt, features,
                    radius, nsample, use_xyz=True):
    idx, empty = ball_query(xyz, xyz_batch_cnt, new_xyz, new_xyz_batch_cnt,
                            radius, nsample)
    return group_features(idx, empty, xyz, new_xyz, features, use_xyz=use_xyz)


# ----------------------------------------------------------------------------
# StackSAModuleMSG forward
# ----------------------------------------------------------------------------
def stack_sa_module_msg(xyz, xyz_batch_cnt, new_xyz, new_xyz_batch_cnt, features,
                        radii, nsamples, weights_per_scale,
                        use_xyz=True, pool_method='max_pool'):
    if pool_method not in ('max_pool', 'avg_pool'):
        raise NotImplementedError(pool_method)

    M = int(new_xyz.shape[0])
    c0 = (3 if use_xyz else 0) + int(features.shape[1])
    c0_pad = _round_up(c0, 8)
    tile_m, m_pad = _plan_tiles(M)

    packed_xs = []
    for radius, nsample in zip(radii, nsamples):
        idx, empty = ball_query(xyz, xyz_batch_cnt, new_xyz, new_xyz_batch_cnt,
                                radius, nsample)
        packed_xs.append(group_features_packed(idx, empty, xyz, new_xyz, features,
                                               use_xyz, m_pad, c0_pad))

    packed_ws, layer_counts, c_outs, c_out_pads = _prepare_packed_weights(
        weights_per_scale, c0_pad)

    new_features = fused_mlp_pool_packed(
        packed_xs, packed_ws, layer_counts, c_outs, c_out_pads,
        M, tile_m, m_pad, pool_method)
    return new_xyz, new_features


def init_scale_weights(key, mlp_spec, use_xyz=True):
    """Conv2d(1x1, bias=False) kaiming-normal weights with eval-mode BN folded in."""
    spec = list(mlp_spec)
    if use_xyz:
        spec[0] += 3
    bn_eps = 1e-5
    bn_scale = 1.0 / math.sqrt(1.0 + bn_eps)   # gamma=1, running_var=1, mean=0, beta=0
    weights = []
    for k in range(len(spec) - 1):
        key, sub = jax.random.split(key)
        c_in, c_out = spec[k], spec[k + 1]
        std = math.sqrt(2.0 / c_in)            # kaiming_normal_, fan_in, 1x1 kernel
        w = jax.random.normal(sub, (c_in, c_out), dtype=jnp.float32) * std
        weights.append(w * bn_scale)           # fold BN (eval mode) into conv weight
    return key, weights


# ----------------------------------------------------------------------------
# Pure-JAX f32 reference for sanity checking
# ----------------------------------------------------------------------------
def _ref_mlp_pool(grouped, weights, pool_method):
    h = grouped
    for w in weights:
        h = jnp.maximum(jnp.einsum('msc,co->mso', h, w), 0.0)
    return jnp.max(h, axis=1) if pool_method == 'max_pool' else jnp.mean(h, axis=1)


if __name__ == "__main__":
    key = jax.random.PRNGKey(0)

    B = 2
    N_per, M_per = 16, 8
    C_feat = 4
    N, M = B * N_per, B * M_per

    radii = [0.5, 1.0]
    nsamples = [8, 16]
    mlps = [[C_feat, 16, 32], [C_feat, 16, 32]]   # use_xyz adds +3 to the first layer
    use_xyz = True
    pool_method = 'max_pool'

    key, k1, k2, k3 = jax.random.split(key, 4)
    xyz = jax.random.uniform(k1, (N, 3), dtype=jnp.float32)
    new_xyz = jax.random.uniform(k2, (M, 3), dtype=jnp.float32)
    features = jax.random.normal(k3, (N, C_feat), dtype=jnp.float32)
    xyz_batch_cnt = jnp.array([N_per] * B, dtype=jnp.int32)
    new_xyz_batch_cnt = jnp.array([M_per] * B, dtype=jnp.int32)

    weights_per_scale = []
    for spec in mlps:
        key, ws = init_scale_weights(key, spec, use_xyz=use_xyz)
        weights_per_scale.append(ws)

    out_xyz, out_feat = stack_sa_module_msg(
        xyz, xyz_batch_cnt, new_xyz, new_xyz_batch_cnt, features,
        radii, nsamples, weights_per_scale,
        use_xyz=use_xyz, pool_method=pool_method)
    out_feat = jax.block_until_ready(out_feat)

    assert out_xyz.shape == (M, 3)
    assert out_feat.shape == (M, sum(spec[-1] for spec in mlps))

    # sanity check against pure-JAX f32 reference (kernel matmuls are bf16-in/f32-acc,
    # so tolerance is relaxed accordingly)
    refs = []
    for radius, nsample, ws in zip(radii, nsamples, weights_per_scale):
        g = query_and_group(xyz, xyz_batch_cnt, new_xyz, new_xyz_batch_cnt,
                            features, radius, nsample, use_xyz=use_xyz)
        refs.append(_ref_mlp_pool(g, ws, pool_method))
    ref = jnp.concatenate(refs, axis=1)
    assert bool(jnp.allclose(out_feat, ref, rtol=5e-2, atol=5e-2)), "mismatch vs reference"

    print("KERNEL_OK")
</pallas_src>

<mosaic_0001>
module attributes {stable_mosaic.version = 11 : i64} {
  func.func @kernel(%arg0: i32, %arg1: memref<8x8x128xbf16, #tpu.memory_space<vmem>>, %arg2: memref<16x8x128xbf16, #tpu.memory_space<vmem>>, %arg3: memref<128x256xbf16, #tpu.memory_space<vmem>>, %arg4: memref<256x512xbf16, #tpu.memory_space<vmem>>, %arg5: memref<128x256xbf16, #tpu.memory_space<vmem>>, %arg6: memref<256x512xbf16, #tpu.memory_space<vmem>>, %arg7: memref<8x1024xf32, #tpu.memory_space<vmem>>) attributes {dimension_semantics = [#tpu.dimension_semantics<parallel>], iteration_bounds = array<i64: 1>, scalar_prefetch = 0 : i64, scratch_operands = 0 : i64, tpu.core_type = #tpu.core_type<tc>, window_params = [{transform_indices = @transform_0, window_bounds = array<i64: 8, 8, 128>}, {transform_indices = @transform_1, window_bounds = array<i64: 16, 8, 128>}, {pipeline_mode = #tpu.pipeline_mode<synchronous>, transform_indices = @transform_2, window_bounds = array<i64: 128, 256>}, {pipeline_mode = #tpu.pipeline_mode<synchronous>, transform_indices = @transform_3, window_bounds = array<i64: 256, 512>}, {pipeline_mode = #tpu.pipeline_mode<synchronous>, transform_indices = @transform_4, window_bounds = array<i64: 128, 256>}, {pipeline_mode = #tpu.pipeline_mode<synchronous>, transform_indices = @transform_5, window_bounds = array<i64: 256, 512>}, {transform_indices = @transform_6, window_bounds = array<i64: 8, 1024>}]} {
    %c0 = arith.constant 0 : index
    %c0_0 = arith.constant 0 : index
    %c0_1 = arith.constant 0 : index
    %0 = vector.load %arg1[%c0, %c0_0, %c0_1] : memref<8x8x128xbf16, #tpu.memory_space<vmem>>, vector<8x8x128xbf16>
    %1 = vector.shape_cast %0 : vector<8x8x128xbf16> to vector<64x128xbf16>
    %c0_2 = arith.constant 0 : index
    %c0_3 = arith.constant 0 : index
    %2 = vector.load %arg3[%c0_2, %c0_3] : memref<128x256xbf16, #tpu.memory_space<vmem>>, vector<128x256xbf16>
    %cst = arith.constant dense<0.000000e+00> : vector<64x256xf32>
    %3 = tpu.matmul %1, %2, %cst {dimension_numbers = #tpu.dot_dimension_numbers<[1], [0], [0], [1], [0, 0, 1, 1], [], []>} : vector<64x128xbf16>, vector<128x256xbf16>, vector<64x256xf32> -> vector<64x256xf32>
    %cst_4 = arith.constant 0.000000e+00 : f32
    %4 = vector.broadcast %cst_4 : f32 to vector<64x256xf32>
    %5 = arith.maximumf %3, %4 : vector<64x256xf32>
    %6 = arith.truncf %5 : vector<64x256xf32> to vector<64x256xbf16>
    %c0_5 = arith.constant 0 : index
    %c0_6 = arith.constant 0 : index
    %7 = vector.load %arg4[%c0_5, %c0_6] : memref<256x512xbf16, #tpu.memory_space<vmem>>, vector<256x512xbf16>
    %cst_7 = arith.constant dense<0.000000e+00> : vector<64x512xf32>
    %8 = tpu.matmul %6, %7, %cst_7 {dimension_numbers = #tpu.dot_dimension_numbers<[1], [0], [0], [1], [0, 0, 1, 1], [], []>} : vector<64x256xbf16>, vector<256x512xbf16>, vector<64x512xf32> -> vector<64x512xf32>
    %cst_8 = arith.constant 0.000000e+00 : f32
    %9 = vector.broadcast %cst_8 : f32 to vector<64x512xf32>
    %10 = arith.maximumf %8, %9 : vector<64x512xf32>
    %11 = vector.extract_strided_slice %10 {offsets = [0, 0], sizes = [8, 512], strides = [1, 1]} : vector<64x512xf32> to vector<8x512xf32>
    %12 = vector.extract_strided_slice %10 {offsets = [8, 0], sizes = [8, 512], strides = [1, 1]} : vector<64x512xf32> to vector<8x512xf32>
    %13 = arith.maximumf %11, %12 : vector<8x512xf32>
    %14 = vector.extract_strided_slice %10 {offsets = [16, 0], sizes = [8, 512], strides = [1, 1]} : vector<64x512xf32> to vector<8x512xf32>
    %15 = arith.maximumf %13, %14 : vector<8x512xf32>
    %16 = vector.extract_strided_slice %10 {offsets = [24, 0], sizes = [8, 512], strides = [1, 1]} : vector<64x512xf32> to vector<8x512xf32>
    %17 = arith.maximumf %15, %16 : vector<8x512xf32>
    %18 = vector.extract_strided_slice %10 {offsets = [32, 0], sizes = [8, 512], strides = [1, 1]} : vector<64x512xf32> to vector<8x512xf32>
    %19 = arith.maximumf %17, %18 : vector<8x512xf32>
    %20 = vector.extract_strided_slice %10 {offsets = [40, 0], sizes = [8, 512], strides = [1, 1]} : vector<64x512xf32> to vector<8x512xf32>
    %21 = arith.maximumf %19, %20 : vector<8x512xf32>
    %22 = vector.extract_strided_slice %10 {offsets = [48, 0], sizes = [8, 512], strides = [1, 1]} : vector<64x512xf32> to vector<8x512xf32>
    %23 = arith.maximumf %21, %22 : vector<8x512xf32>
    %24 = vector.extract_strided_slice %10 {offsets = [56, 0], sizes = [8, 512], strides = [1, 1]} : vector<64x512xf32> to vector<8x512xf32>
    %25 = arith.maximumf %23, %24 : vector<8x512xf32>
    %c0_9 = arith.constant 0 : index
    %c0_10 = arith.constant 0 : index
    %26 = vector.load %arg7[%c0_9, %c0_10] : memref<8x1024xf32, #tpu.memory_space<vmem>>, vector<8x512xf32>
    tpu.vector_store %arg7[%c0_9, %c0_10], %25 {strides = array<i32>} : memref<8x1024xf32, #tpu.memory_space<vmem>>, vector<8x512xf32>,
    %c0_11 = arith.constant 0 : index
    %c0_12 = arith.constant 0 : index
    %c0_13 = arith.constant 0 : index
    %27 = vector.load %arg2[%c0_11, %c0_12, %c0_13] : memref<16x8x128xbf16, #tpu.memory_space<vmem>>, vector<16x8x128xbf16>
    %28 = vector.shape_cast %27 : vector<16x8x128xbf16> to vector<128x128xbf16>
    %c0_14 = arith.constant 0 : index
    %c0_15 = arith.constant 0 : index
    %29 = vector.load %arg5[%c0_14, %c0_15] : memref<128x256xbf16, #tpu.memory_space<vmem>>, vector<128x256xbf16>
    %cst_16 = arith.constant dense<0.000000e+00> : vector<128x256xf32>
    %30 = tpu.matmul %28, %29, %cst_16 {dimension_numbers = #tpu.dot_dimension_numbers<[1], [0], [0], [1], [0, 0, 1, 1], [], []>} : vector<128x128xbf16>, vector<128x256xbf16>, vector<128x256xf32> -> vector<128x256xf32>
    %cst_17 = arith.constant 0.000000e+00 : f32
    %31 = vector.broadcast %cst_17 : f32 to vector<128x256xf32>
    %32 = arith.maximumf %30, %31 : vector<128x256xf32>
    %33 = arith.truncf %32 : vector<128x256xf32> to vector<128x256xbf16>
    %c0_18 = arith.constant 0 : index
    %c0_19 = arith.constant 0 : index
    %34 = vector.load %arg6[%c0_18, %c0_19] : memref<256x512xbf16, #tpu.memory_space<vmem>>, vector<256x512xbf16>
    %cst_20 = arith.constant dense<0.000000e+00> : vector<128x512xf32>
    %35 = tpu.matmul %33, %34, %cst_20 {dimension_numbers = #tpu.dot_dimension_numbers<[1], [0], [0], [1], [0, 0, 1, 1], [], []>} : vector<128x256xbf16>, vector<256x512xbf16>, vector<128x512xf32> -> vector<128x512xf32>
    %cst_21 = arith.constant 0.000000e+00 : f32
    %36 = vector.broadcast %cst_21 : f32 to vector<128x512xf32>
    %37 = arith.maximumf %35, %36 : vector<128x512xf32>
    %38 = vector.extract_strided_slice %37 {offsets = [0, 0], sizes = [8, 512], strides = [1, 1]} : vector<128x512xf32> to vector<8x512xf32>
    %39 = vector.extract_strided_slice %37 {offsets = [8, 0], sizes = [8, 512], strides = [1, 1]} : vector<128x512xf32> to vector<8x512xf32>
    %40 = arith.maximumf %38, %39 : vector<8x512xf32>
    %41 = vector.extract_strided_slice %37 {offsets = [16, 0], sizes = [8, 512], strides = [1, 1]} : vector<128x512xf32> to vector<8x512xf32>
    %42 = arith.maximumf %40, %41 : vector<8x512xf32>
    %43 = vector.extract_strided_slice %37 {offsets = [24, 0], sizes = [8, 512], strides = [1, 1]} : vector<128x512xf32> to vector<8x512xf32>
    %44 = arith.maximumf %42, %43 : vector<8x512xf32>
    %45 = vector.extract_strided_slice %37 {offsets = [32, 0], sizes = [8, 512], strides = [1, 1]} : vector<128x512xf32> to vector<8x512xf32>
    %46 = arith.maximumf %44, %45 : vector<8x512xf32>
    %47 = vector.extract_strided_slice %37 {offsets = [40, 0], sizes = [8, 512], strides = [1, 1]} : vector<128x512xf32> to vector<8x512xf32>
    %48 = arith.maximumf %46, %47 : vector<8x512xf32>
    %49 = vector.extract_strided_slice %37 {offsets = [48, 0], sizes = [8, 512], strides = [1, 1]} : vector<128x512xf32> to vector<8x512xf32>
    %50 = arith.maximumf %48, %49 : vector<8x512xf32>
    %51 = vector.extract_strided_slice %37 {offsets = [56, 0], sizes = [8, 512], strides = [1, 1]} : vector<128x512xf32> to vector<8x512xf32>
    %52 = arith.maximumf %50, %51 : vector<8x512xf32>
    %53 = vector.extract_strided_slice %37 {offsets = [64, 0], sizes = [8, 512], strides = [1, 1]} : vector<128x512xf32> to vector<8x512xf32>
    %54 = arith.maximumf %52, %53 : vector<8x512xf32>
    %55 = vector.extract_strided_slice %37 {offsets = [72, 0], sizes = [8, 512], strides = [1, 1]} : vector<128x512xf32> to vector<8x512xf32>
    %56 = arith.maximumf %54, %55 : vector<8x512xf32>
    %57 = vector.extract_strided_slice %37 {offsets = [80, 0], sizes = [8, 512], strides = [1, 1]} : vector<128x512xf32> to vector<8x512xf32>
    %58 = arith.maximumf %56, %57 : vector<8x512xf32>
    %59 = vector.extract_strided_slice %37 {offsets = [88, 0], sizes = [8, 512], strides = [1, 1]} : vector<128x512xf32> to vector<8x512xf32>
    %60 = arith.maximumf %58, %59 : vector<8x512xf32>
    %61 = vector.extract_strided_slice %37 {offsets = [96, 0], sizes = [8, 512], strides = [1, 1]} : vector<128x512xf32> to vector<8x512xf32>
    %62 = arith.maximumf %60, %61 : vector<8x512xf32>
    %63 = vector.extract_strided_slice %37 {offsets = [104, 0], sizes = [8, 512], strides = [1, 1]} : vector<128x512xf32> to vector<8x512xf32>
    %64 = arith.maximumf %62, %63 : vector<8x512xf32>
    %65 = vector.extract_strided_slice %37 {offsets = [112, 0], sizes = [8, 512], strides = [1, 1]} : vector<128x512xf32> to vector<8x512xf32>
    %66 = arith.maximumf %64, %65 : vector<8x512xf32>
    %67 = vector.extract_strided_slice %37 {offsets = [120, 0], sizes = [8, 512], strides = [1, 1]} : vector<128x512xf32> to vector<8x512xf32>
    %68 = arith.maximumf %66, %67 : vector<8x512xf32>
    %c0_22 = arith.constant 0 : index
    %c512 = arith.constant 512 : index
    %69 = vector.load %arg7[%c0_22, %c512] : memref<8x1024xf32, #tpu.memory_space<vmem>>, vector<8x512xf32>
    tpu.vector_store %arg7[%c0_22, %c512], %68 {strides = array<i32>} : memref<8x1024xf32, #tpu.memory_space<vmem>>, vector<8x512xf32>,
    return
  }
  func.func @transform_0(%arg0: i32) -> (i32, i32, i32) {
    %c0_i32 = arith.constant 0 : i32
    %c0_i32_0 = arith.constant 0 : i32
    %c0_i32_1 = arith.constant 0 : i32
    return %c0_i32, %arg0, %c0_i32_0 : i32, i32, i32
  }
  func.func @transform_1(%arg0: i32) -> (i32, i32, i32) {
    %c0_i32 = arith.constant 0 : i32
    %c0_i32_0 = arith.constant 0 : i32
    %c0_i32_1 = arith.constant 0 : i32
    return %c0_i32, %arg0, %c0_i32_0 : i32, i32, i32
  }
  func.func @transform_2(%arg0: i32) -> (i32, i32) {
    %c0_i32 = arith.constant 0 : i32
    %c0_i32_0 = arith.constant 0 : i32
    %c0_i32_1 = arith.constant 0 : i32
    return %c0_i32, %c0_i32_0 : i32, i32
  }
  func.func @transform_3(%arg0: i32) -> (i32, i32) {
    %c0_i32 = arith.constant 0 : i32
    %c0_i32_0 = arith.constant 0 : i32
    %c0_i32_1 = arith.constant 0 : i32
    return %c0_i32, %c0_i32_0 : i32, i32
  }
  func.func @transform_4(%arg0: i32) -> (i32, i32) {
    %c0_i32 = arith.constant 0 : i32
    %c0_i32_0 = arith.constant 0 : i32
    %c0_i32_1 = arith.constant 0 : i32
    return %c0_i32, %c0_i32_0 : i32, i32
  }
  func.func @transform_5(%arg0: i32) -> (i32, i32) {
    %c0_i32 = arith.constant 0 : i32
    %c0_i32_0 = arith.constant 0 : i32
    %c0_i32_1 = arith.constant 0 : i32
    return %c0_i32, %c0_i32_0 : i32, i32
  }
  func.func @transform_6(%arg0: i32) -> (i32, i32) {
    %c0_i32 = arith.constant 0 : i32
    %c0_i32_0 = arith.constant 0 : i32
    return %arg0, %c0_i32 : i32, i32
  }
}

</mosaic_0001>

<llo_original>
// kernel: tpu_custom_call.1
$region0: #{tpu_custom_call.1}
  #allocation0 [shape = 'u32[]', space=smem, size = 0x4, offset = 0x4, fixed_abs, tag = 'smem constant byte address 0x4 - core index']
  #allocation1 [shape = 'u32[144,128]{1,0:T(1,128)}', space=vmem, size = 0x12000, scoped, tag = 'internal scratch']
  %s0 = inlined_call_operand.hbm [shape: bf16[8,8,128], index: 0, kind: input, shape index: {}]
  %s1 = inlined_call_operand.hbm [shape: bf16[16,8,128], index: 1, kind: input, shape index: {}]
  %s2 = inlined_call_operand.hbm [shape: bf16[128,256], index: 2, kind: input, shape index: {}]
  %s3 = inlined_call_operand.hbm [shape: bf16[256,512], index: 3, kind: input, shape index: {}]
  %s4 = inlined_call_operand.hbm [shape: bf16[128,256], index: 4, kind: input, shape index: {}]
  %s5 = inlined_call_operand.hbm [shape: bf16[256,512], index: 5, kind: input, shape index: {}]
  %s6 = inlined_call_operand.hbm [shape: f32[8,1024], index: 6, kind: output, shape index: {}]
  %s7 = sld [smem:[#allocation0]]
  $region58: #{tpu_custom_call.1} parent=0
    _
  %s9 = ssub.s32 1, %s7
  %s10 = scalar_select 0, %s9, %s7
  $region1: #{tpu_custom_call.1} parent=0
    #allocation2 [shape = 'u8[16384]{0}', space=vmem, size = 0x4000, scoped, tag = 'input window, operand 0, single buffered']
    #allocation3 [shape = 's32[1]{0}', space=sflag, size = 0x4, scoped, tag = 'scoped memory for tpu_custom_call.1']
    #allocation4 [shape = 's32[1]{0}', space=sflag, size = 0x4, scoped, tag = 'scoped memory for tpu_custom_call.1']
    #allocation5 [shape = 'u8[32768]{0}', space=vmem, size = 0x8000, scoped, tag = 'input window, operand 1, single buffered']
    #allocation6 [shape = 's32[1]{0}', space=sflag, size = 0x4, scoped, tag = 'scoped memory for tpu_custom_call.1']
    #allocation7 [shape = 'u8[65536]{0}', space=vmem, size = 0x10000, scoped, tag = 'input window, operand 2, single buffered']
    #allocation8 [shape = 'u8[262144]{0}', space=vmem, size = 0x40000, scoped, tag = 'input window, operand 3, single buffered']
    #allocation9 [shape = 's32[1]{0}', space=sflag, size = 0x4, scoped, tag = 'scoped memory for tpu_custom_call.1']
    #allocation10 [shape = 'u8[65536]{0}', space=vmem, size = 0x10000, scoped, tag = 'input window, operand 4, single buffered']
    #allocation11 [shape = 'u8[262144]{0}', space=vmem, size = 0x40000, scoped, tag = 'input window, operand 5, single buffered']
    #allocation12 [shape = 's32[1]{0}', space=sflag, size = 0x4, scoped, tag = 'scoped memory for tpu_custom_call.1']
    #allocation13 [shape = 'u8[32768]{0}', space=vmem, size = 0x8000, scoped, tag = 'output window, operand 0, single buffered']
    %11 = vsyncpa [#allocation3], 0
    %12 = vsyncpa [#allocation6], 0
    %13 = vsyncpa [#allocation9], 0
    %14 = vsyncpa [#allocation12], 0
    %15 = vsyncpa [#allocation4], 0
    // Predicated region
    $region2: #{tpu_custom_call.1} parent=1 // pred_check
      _
    $region3: #{tpu_custom_call.1} parent=1 // pred_check_branch
      %17 = sbr.rel (0) target = $region5
    $region4: #{tpu_custom_call.1} parent=1 // pred_region
      %s19 = ssub.s32 512, 512
      %20 = vsyncadd [#allocation3], %s19
      %s21 = sshll.u32 [#allocation2], 4
      %s22 = int_to_ptr.vmem [resolvable:$true] %s21
      %27 = dma.hbm_to_vmem [thread:$0]  %s0, 512, %s22, [#allocation3], 64, 64, 4
    $region5: #{tpu_custom_call.1} parent=1 // pred_fallthru
      _
    // Predicated region
    $region6: #{tpu_custom_call.1} parent=1 // pred_check
      _
    $region7: #{tpu_custom_call.1} parent=1 // pred_check_branch
      %29 = sbr.rel (0) target = $region9
    $region8: #{tpu_custom_call.1} parent=1 // pred_region
      %s31 = ssub.s32 1024, 1024
      %32 = vsyncadd [#allocation6], %s31
      %s33 = sshll.u32 [#allocation5], 4
      %s34 = int_to_ptr.vmem [resolvable:$true] %s33
      %39 = dma.hbm_to_vmem [thread:$0]  %s1, 1024, %s34, [#allocation6], 64, 64, 4
    $region9: #{tpu_custom_call.1} parent=1 // pred_fallthru
      _
    // Predicated region
    $region10: #{tpu_custom_call.1} parent=1 // pred_check
      _
    $region11: #{tpu_custom_call.1} parent=1 // pred_check_branch
      %41 = sbr.rel (0) target = $region13
    $region12: #{tpu_custom_call.1} parent=1 // pred_region
      %s43 = ssub.s32 2048, 2048
      %44 = vsyncadd [#allocation6], %s43
      %s45 = sshll.u32 [#allocation7], 4
      %s46 = int_to_ptr.vmem [resolvable:$true] %s45
      %51 = dma.hbm_to_vmem [thread:$0]  %s2, 2048, %s46, [#allocation6], 128, 128, 8
    $region13: #{tpu_custom_call.1} parent=1 // pred_fallthru
      _
    // Predicated region
    $region14: #{tpu_custom_call.1} parent=1 // pred_check
      _
    $region15: #{tpu_custom_call.1} parent=1 // pred_check_branch
      %53 = sbr.rel (0) target = $region17
    $region16: #{tpu_custom_call.1} parent=1 // pred_region
      %s55 = ssub.s32 8192, 8192
      %56 = vsyncadd [#allocation9], %s55
      %s57 = sshll.u32 [#allocation8], 4
      %s58 = int_to_ptr.vmem [resolvable:$true] %s57
      %63 = dma.hbm_to_vmem [thread:$0]  %s3, 8192, %s58, [#allocation9], 256, 256, 16
    $region17: #{tpu_custom_call.1} parent=1 // pred_fallthru
      _
    // Predicated region
    $region18: #{tpu_custom_call.1} parent=1 // pred_check
      _
    $region19: #{tpu_custom_call.1} parent=1 // pred_check_branch
      %65 = sbr.rel (0) target = $region21
    $region20: #{tpu_custom_call.1} parent=1 // pred_region
      %s67 = ssub.s32 2048, 2048
      %68 = vsyncadd [#allocation9], %s67
      %s69 = sshll.u32 [#allocation10], 4
      %s70 = int_to_ptr.vmem [resolvable:$true] %s69
      %75 = dma.hbm_to_vmem [thread:$0]  %s4, 2048, %s70, [#allocation9], 128, 128, 8
    $region21: #{tpu_custom_call.1} parent=1 // pred_fallthru
      _
    // Predicated region
    $region22: #{tpu_custom_call.1} parent=1 // pred_check
      _
    $region23: #{tpu_custom_call.1} parent=1 // pred_check_branch
      %77 = sbr.rel (0) target = $region25
    $region24: #{tpu_custom_call.1} parent=1 // pred_region
      %s79 = ssub.s32 8192, 8192
      %80 = vsyncadd [#allocation12], %s79
      %s81 = sshll.u32 [#allocation11], 4
      %s82 = int_to_ptr.vmem [resolvable:$true] %s81
      %87 = dma.hbm_to_vmem [thread:$0]  %s5, 8192, %s82, [#allocation12], 256, 256, 16
    $region25: #{tpu_custom_call.1} parent=1 // pred_fallthru
      _
    // Predicated region
    $region26: #{tpu_custom_call.1} parent=1 // pred_check
      _
    $region27: #{tpu_custom_call.1} parent=1 // pred_check_branch
      %89 = sbr.rel (0) target = $region29
    $region28: #{tpu_custom_call.1} parent=1 // pred_region
      %90 = dma.done [#allocation3], 512
    $region29: #{tpu_custom_call.1} parent=1 // pred_fallthru
      _
    // Predicated region
    $region30: #{tpu_custom_call.1} parent=1 // pred_check
      _
    $region31: #{tpu_custom_call.1} parent=1 // pred_check_branch
      %92 = sbr.rel (0) target = $region33
    $region32: #{tpu_custom_call.1} parent=1 // pred_region
      %93 = dma.done [#allocation6], 1024
    $region33: #{tpu_custom_call.1} parent=1 // pred_fallthru
      _
    // Predicated region
    $region34: #{tpu_custom_call.1} parent=1 // pred_check
      _
    $region35: #{tpu_custom_call.1} parent=1 // pred_check_branch
      %95 = sbr.rel (0) target = $region37
    $region36: #{tpu_custom_call.1} parent=1 // pred_region
      %96 = dma.done [#allocation6], 2048
    $region37: #{tpu_custom_call.1} parent=1 // pred_fallthru
      _
    // Predicated region
    $region38: #{tpu_custom_call.1} parent=1 // pred_check
      _
    $region39: #{tpu_custom_call.1} parent=1 // pred_check_branch
      %98 = sbr.rel (0) target = $region41
    $region40: #{tpu_custom_call.1} parent=1 // pred_region
      %99 = dma.done [#allocation9], 8192
    $region41: #{tpu_custom_call.1} parent=1 // pred_fallthru
      _
    // Predicated region
    $region42: #{tpu_custom_call.1} parent=1 // pred_check
      _
    $region43: #{tpu_custom_call.1} parent=1 // pred_check_branch
      %101 = sbr.rel (0) target = $region45
    $region44: #{tpu_custom_call.1} parent=1 // pred_region
      %102 = dma.done [#allocation9], 2048
    $region45: #{tpu_custom_call.1} parent=1 // pred_fallthru
      _
    // Predicated region
    $region46: #{tpu_custom_call.1} parent=1 // pred_check
      _
    $region47: #{tpu_custom_call.1} parent=1 // pred_check_branch
      %104 = sbr.rel (0) target = $region49
    $region48: #{tpu_custom_call.1} parent=1 // pred_region
      %105 = dma.done [#allocation12], 8192
    $region49: #{tpu_custom_call.1} parent=1 // pred_fallthru
      _
    %v107 = vld [vmem:[#allocation2] sm:$0xf]
    %v108 = vld [vmem:[#allocation2 + $0x4] sm:$0xf]
    %v109 = vld [vmem:[#allocation2 + $0x8] sm:$0xf]
    %v110 = vld [vmem:[#allocation2 + $0xc] sm:$0xf]
    %v111 = vld [vmem:[#allocation2 + $0x10] sm:$0xf]
    %v112 = vld [vmem:[#allocation2 + $0x14] sm:$0xf]
    %v113 = vld [vmem:[#allocation2 + $0x18] sm:$0xf]
    %v114 = vld [vmem:[#allocation2 + $0x1c] sm:$0xf]
    %v115 = vld [vmem:[#allocation7] sm:$0xff]
    %v116 = vld [vmem:[#allocation7 + $0x8] sm:$0xff]
    %v117 = vld [vmem:[#allocation7 + $0x10] sm:$0xff]
    %v118 = vld [vmem:[#allocation7 + $0x18] sm:$0xff]
    %v119 = vld [vmem:[#allocation7 + $0x20] sm:$0xff]
    %v120 = vld [vmem:[#allocation7 + $0x28] sm:$0xff]
    %v121 = vld [vmem:[#allocation7 + $0x30] sm:$0xff]
    %v122 = vld [vmem:[#allocation7 + $0x38] sm:$0xff]
    %v123 = vld [vmem:[#allocation7 + $0x40] sm:$0xff]
    %v124 = vld [vmem:[#allocation7 + $0x48] sm:$0xff]
    %v125 = vld [vmem:[#allocation7 + $0x50] sm:$0xff]
    %v126 = vld [vmem:[#allocation7 + $0x58] sm:$0xff]
    %v127 = vld [vmem:[#allocation7 + $0x60] sm:$0xff]
    %v128 = vld [vmem:[#allocation7 + $0x68] sm:$0xff]
    %v129 = vld [vmem:[#allocation7 + $0x70] sm:$0xff]
    %v130 = vld [vmem:[#allocation7 + $0x78] sm:$0xff]
    %v139 = vunpack.c.l.b16 %v107
    %v140 = vunpack.c.l.b16 %v108
    %v141 = vunpack.c.l.b16 %v109
    %v142 = vunpack.c.l.b16 %v110
    %v143 = vunpack.c.l.b16 %v111
    %v144 = vunpack.c.l.b16 %v112
    %v145 = vunpack.c.l.b16 %v113
    %v146 = vunpack.c.l.b16 %v114
    %v147 = vpack.c.b16 %v140, %v139
    %v148 = vpack.c.b16 %v142, %v141
    %v149 = vpack.c.b16 %v144, %v143
    %v150 = vpack.c.b16 %v146, %v145
    %v171 = vunpack.c.l.b16 %v115
    %v172 = vunpack.c.h.b16 %v115
    %v173 = vunpack.c.l.b16 %v116
    %v174 = vunpack.c.h.b16 %v116
    %v175 = vunpack.c.l.b16 %v117
    %v176 = vunpack.c.h.b16 %v117
    %v177 = vunpack.c.l.b16 %v118
    %v178 = vunpack.c.h.b16 %v118
    %v179 = vunpack.c.l.b16 %v119
    %v180 = vunpack.c.h.b16 %v119
    %v181 = vunpack.c.l.b16 %v120
    %v182 = vunpack.c.h.b16 %v120
    %v183 = vunpack.c.l.b16 %v121
    %v184 = vunpack.c.h.b16 %v121
    %v185 = vunpack.c.l.b16 %v122
    %v186 = vunpack.c.h.b16 %v122
    %v187 = vunpack.c.l.b16 %v123
    %v188 = vunpack.c.h.b16 %v123
    %v189 = vunpack.c.l.b16 %v124
    %v190 = vunpack.c.h.b16 %v124
    %v191 = vunpack.c.l.b16 %v125
    %v192 = vunpack.c.h.b16 %v125
    %v193 = vunpack.c.l.b16 %v126
    %v194 = vunpack.c.h.b16 %v126
    %v195 = vunpack.c.l.b16 %v127
    %v196 = vunpack.c.h.b16 %v127
    %v197 = vunpack.c.l.b16 %v128
    %v198 = vunpack.c.h.b16 %v128
    %v199 = vunpack.c.l.b16 %v129
    %v200 = vunpack.c.h.b16 %v129
    %v201 = vunpack.c.l.b16 %v130
    %v202 = vunpack.c.h.b16 %v130
    %v203 = vpack.c.b16 %v173, %v171
    %v204 = vpack.c.b16 %v174, %v172
    %v205 = vpack.c.b16 %v177, %v175
    %v206 = vpack.c.b16 %v178, %v176
    %v207 = vpack.c.b16 %v181, %v179
    %v208 = vpack.c.b16 %v182, %v180
    %v209 = vpack.c.b16 %v185, %v183
    %v210 = vpack.c.b16 %v186, %v184
    %v211 = vpack.c.b16 %v189, %v187
    %v212 = vpack.c.b16 %v190, %v188
    %v213 = vpack.c.b16 %v193, %v191
    %v214 = vpack.c.b16 %v194, %v192
    %v215 = vpack.c.b16 %v197, %v195
    %v216 = vpack.c.b16 %v198, %v196
    %v217 = vpack.c.b16 %v201, %v199
    %v218 = vpack.c.b16 %v202, %v200
    %235 = vmatprep.subr.bf16.mxu0 %v218
    %236 = vmatpush1.bf16.msra.mxu0 %v217
    %237 = vmatprep.subr.bf16.mxu0 %v216
    %238 = vmatpush1.bf16.msra.mxu0 %v215
    %239 = vmatprep.subr.bf16.mxu0 %v214
    %240 = vmatpush1.bf16.msra.mxu0 %v213
    %241 = vmatprep.subr.bf16.mxu0 %v212
    %242 = vmatpush1.bf16.msra.mxu0 %v211
    %243 = vmatprep.subr.bf16.mxu0 %v210
    %244 = vmatpush1.bf16.msra.mxu0 %v209
    %245 = vmatprep.subr.bf16.mxu0 %v208
    %246 = vmatpush1.bf16.msra.mxu0 %v207
    %247 = vmatprep.subr.bf16.mxu0 %v206
    %248 = vmatpush1.bf16.msra.mxu0 %v205
    %249 = vmatprep.subr.bf16.mxu0 %v204
    %250 = vmatpush1.bf16.msra.mxu0 %v203
    %251 = vmatprep.subr.bf16.mxu0 0
    %252 = vmatpush2.bf16.msra.mxu0 0
    %253 = vmatprep.subr.bf16.mxu0 0
    %254 = vmatpush2.bf16.msra.mxu0 0
    %255 = vmatprep.subr.bf16.mxu0 0
    %256 = vmatpush2.bf16.msra.mxu0 0
    %257 = vmatprep.subr.bf16.mxu0 0
    %258 = vmatpush2.bf16.msra.mxu0 0
    %259 = vmatprep.subr.bf16.mxu0 0
    %260 = vmatpush2.bf16.msra.mxu0 0
    %261 = vmatprep.subr.bf16.mxu0 0
    %262 = vmatpush2.bf16.msra.mxu0 0
    %263 = vmatprep.subr.bf16.mxu0 0
    %264 = vmatpush2.bf16.msra.mxu0 0
    %265 = vmatprep.subr.bf16.mxu0 0
    %266 = vmatpush2.bf16.msra.mxu0 0
    %267 = vmatprep.mubr.bf16.mxu0 0
    %268 = vmatmul.mubr.bf16.gmra.mxu0 %v147
    %v269 = vpop.f32.mrf.mxu0
    %v270 = vadd.f32 0.0, %v269
    %v271 = vpop.f32.mrf.mxu0
    %v272 = vadd.f32 0.0, %v271
    %v273 = vpop.f32.mrf.mxu0
    %v274 = vadd.f32 0.0, %v273
    %v275 = vpop.f32.mrf.mxu0
    %v276 = vadd.f32 0.0, %v275
    %277 = vmatprep.mubr.bf16.mxu0 0
    %278 = vmatmul.mubr.bf16.gmra.mxu0 %v148
    %v279 = vpop.f32.mrf.mxu0
    %v280 = vadd.f32 0.0, %v279
    %v281 = vpop.f32.mrf.mxu0
    %v282 = vadd.f32 0.0, %v281
    %v283 = vpop.f32.mrf.mxu0
    %v284 = vadd.f32 0.0, %v283
    %v285 = vpop.f32.mrf.mxu0
    %v286 = vadd.f32 0.0, %v285
    %287 = vmatprep.mubr.bf16.mxu0 0
    %288 = vmatmul.mubr.bf16.gmra.mxu0 %v149
    %v289 = vpop.f32.mrf.mxu0
    %v290 = vadd.f32 0.0, %v289
    %v291 = vpop.f32.mrf.mxu0
    %v292 = vadd.f32 0.0, %v291
    %v293 = vpop.f32.mrf.mxu0
    %v294 = vadd.f32 0.0, %v293
    %v295 = vpop.f32.mrf.mxu0
    %v296 = vadd.f32 0.0, %v295
    %297 = vmatprep.mubr.bf16.mxu0 0
    %298 = vmatmul.mubr.bf16.gmra.mxu0 %v150
    %v299 = vpop.f32.mrf.mxu0
    %v300 = vadd.f32 0.0, %v299
    %v301 = vpop.f32.mrf.mxu0
    %v302 = vadd.f32 0.0, %v301
    %v303 = vpop.f32.mrf.mxu0
    %v304 = vadd.f32 0.0, %v303
    %v305 = vpop.f32.mrf.mxu0
    %v306 = vadd.f32 0.0, %v305
    %307 = vdwg.mxu0
    %v308 = vmax.f32 %v270, 0.0
    %v309 = vmax.f32 %v272, 0.0
    %v310 = vmax.f32 %v274, 0.0
    %v311 = vmax.f32 %v276, 0.0
    %v312 = vmax.f32 %v280, 0.0
    %v313 = vmax.f32 %v282, 0.0
    %v314 = vmax.f32 %v284, 0.0
    %v315 = vmax.f32 %v286, 0.0
    %v316 = vmax.f32 %v290, 0.0
    %v317 = vmax.f32 %v292, 0.0
    %v318 = vmax.f32 %v294, 0.0
    %v319 = vmax.f32 %v296, 0.0
    %v320 = vmax.f32 %v300, 0.0
    %v321 = vmax.f32 %v302, 0.0
    %v322 = vmax.f32 %v304, 0.0
    %v323 = vmax.f32 %v306, 0.0
    %v324 = vpack.c.bf16 %v310, %v308
    %v325 = vpack.c.bf16 %v311, %v309
    %v326 = vpack.c.bf16 %v314, %v312
    %v327 = vpack.c.bf16 %v315, %v313
    %v328 = vpack.c.bf16 %v318, %v316
    %v329 = vpack.c.bf16 %v319, %v317
    %v330 = vpack.c.bf16 %v322, %v320
    %v331 = vpack.c.bf16 %v323, %v321
    %v332 = vld [vmem:[#allocation8] sm:$0xff]
    %v333 = vld [vmem:[#allocation8 + $0x8] sm:$0xff]
    %v334 = vld [vmem:[#allocation8 + $0x10] sm:$0xff]
    %v335 = vld [vmem:[#allocation8 + $0x18] sm:$0xff]
    %v336 = vld [vmem:[#allocation8 + $0x20] sm:$0xff]
    %v337 = vld [vmem:[#allocation8 + $0x28] sm:$0xff]
    %v338 = vld [vmem:[#allocation8 + $0x30] sm:$0xff]
    %v339 = vld [vmem:[#allocation8 + $0x38] sm:$0xff]
    %v340 = vld [vmem:[#allocation8 + $0x40] sm:$0xff]
    %v341 = vld [vmem:[#allocation8 + $0x48] sm:$0xff]
    %v342 = vld [vmem:[#allocation8 + $0x50] sm:$0xff]
    %v343 = vld [vmem:[#allocation8 + $0x58] sm:$0xff]
    %v344 = vld [vmem:[#allocation8 + $0x60] sm:$0xff]
    %v345 = vld [vmem:[#allocation8 + $0x68] sm:$0xff]
    %v346 = vld [vmem:[#allocation8 + $0x70] sm:$0xff]
    %v347 = vld [vmem:[#allocation8 + $0x78] sm:$0xff]
    %v348 = vld [vmem:[#allocation8 + $0x80] sm:$0xff]
    %v349 = vld [vmem:[#allocation8 + $0x88] sm:$0xff]
    %v350 = vld [vmem:[#allocation8 + $0x90] sm:$0xff]
    %v351 = vld [vmem:[#allocation8 + $0x98] sm:$0xff]
    %v352 = vld [vmem:[#allocation8 + $0xa0] sm:$0xff]
    %v353 = vld [vmem:[#allocation8 + $0xa8] sm:$0xff]
    %v354 = vld [vmem:[#allocation8 + $0xb0] sm:$0xff]
    %v355 = vld [vmem:[#allocation8 + $0xb8] sm:$0xff]
    %v356 = vld [vmem:[#allocation8 + $0xc0] sm:$0xff]
    %v357 = vld [vmem:[#allocation8 + $0xc8] sm:$0xff]
    %v358 = vld [vmem:[#allocation8 + $0xd0] sm:$0xff]
    %v359 = vld [vmem:[#allocation8 + $0xd8] sm:$0xff]
    %v360 = vld [vmem:[#allocation8 + $0xe0] sm:$0xff]
    %v361 = vld [vmem:[#allocation8 + $0xe8] sm:$0xff]
    %v362 = vld [vmem:[#allocation8 + $0xf0] sm:$0xff]
    %v363 = vld [vmem:[#allocation8 + $0xf8] sm:$0xff]
    %v364 = vld [vmem:[#allocation8 + $0x100] sm:$0xff]
    %v365 = vld [vmem:[#allocation8 + $0x108] sm:$0xff]
    %v366 = vld [vmem:[#allocation8 + $0x110] sm:$0xff]
    %v367 = vld [vmem:[#allocation8 + $0x118] sm:$0xff]
    %v368 = vld [vmem:[#allocation8 + $0x120] sm:$0xff]
    %v369 = vld [vmem:[#allocation8 + $0x128] sm:$0xff]
    %v370 = vld [vmem:[#allocation8 + $0x130] sm:$0xff]
    %v371 = vld [vmem:[#allocation8 + $0x138] sm:$0xff]
    %v372 = vld [vmem:[#allocation8 + $0x140] sm:$0xff]
    %v373 = vld [vmem:[#allocation8 + $0x148] sm:$0xff]
    %v374 = vld [vmem:[#allocation8 + $0x150] sm:$0xff]
    %v375 = vld [vmem:[#allocation8 + $0x158] sm:$0xff]
    %v376 = vld [vmem:[#allocation8 + $0x160] sm:$0xff]
    %v377 = vld [vmem:[#allocation8 + $0x168] sm:$0xff]
    %v378 = vld [vmem:[#allocation8 + $0x170] sm:$0xff]
    %v379 = vld [vmem:[#allocation8 + $0x178] sm:$0xff]
    %v380 = vld [vmem:[#allocation8 + $0x180] sm:$0xff]
    %v381 = vld [vmem:[#allocation8 + $0x188] sm:$0xff]
    %v382 = vld [vmem:[#allocation8 + $0x190] sm:$0xff]
    %v383 = vld [vmem:[#allocation8 + $0x198] sm:$0xff]
    %v384 = vld [vmem:[#allocation8 + $0x1a0] sm:$0xff]
    %v385 = vld [vmem:[#allocation8 + $0x1a8] sm:$0xff]
    %v386 = vld [vmem:[#allocation8 + $0x1b0] sm:$0xff]
    %v387 = vld [vmem:[#allocation8 + $0x1b8] sm:$0xff]
    %v388 = vld [vmem:[#allocation8 + $0x1c0] sm:$0xff]
    %v389 = vld [vmem:[#allocation8 + $0x1c8] sm:$0xff]
    %v390 = vld [vmem:[#allocation8 + $0x1d0] sm:$0xff]
    %v391 = vld [vmem:[#allocation8 + $0x1d8] sm:$0xff]
    %v392 = vld [vmem:[#allocation8 + $0x1e0] sm:$0xff]
    %v393 = vld [vmem:[#allocation8 + $0x1e8] sm:$0xff]
    %v394 = vld [vmem:[#allocation8 + $0x1f0] sm:$0xff]
    %v395 = vld [vmem:[#allocation8 + $0x1f8] sm:$0xff]
    %v460 = vunpack.c.l.b16 %v332
    %v461 = vunpack.c.h.b16 %v332
    %v462 = vunpack.c.l.b16 %v333
    %v463 = vunpack.c.h.b16 %v333
    %v464 = vunpack.c.l.b16 %v334
    %v465 = vunpack.c.h.b16 %v334
    %v466 = vunpack.c.l.b16 %v335
    %v467 = vunpack.c.h.b16 %v335
    %v468 = vunpack.c.l.b16 %v336
    %v469 = vunpack.c.h.b16 %v336
    %v470 = vunpack.c.l.b16 %v337
    %v471 = vunpack.c.h.b16 %v337
    %v472 = vunpack.c.l.b16 %v338
    %v473 = vunpack.c.h.b16 %v338
    %v474 = vunpack.c.l.b16 %v339
    %v475 = vunpack.c.h.b16 %v339
    %v476 = vunpack.c.l.b16 %v340
    %v477 = vunpack.c.h.b16 %v340
    %v478 = vunpack.c.l.b16 %v341
    %v479 = vunpack.c.h.b16 %v341
    %v480 = vunpack.c.l.b16 %v342
    %v481 = vunpack.c.h.b16 %v342
    %v482 = vunpack.c.l.b16 %v343
    %v483 = vunpack.c.h.b16 %v343
    %v484 = vunpack.c.l.b16 %v344
    %v485 = vunpack.c.h.b16 %v344
    %v486 = vunpack.c.l.b16 %v345
    %v487 = vunpack.c.h.b16 %v345
    %v488 = vunpack.c.l.b16 %v346
    %v489 = vunpack.c.h.b16 %v346
    %v490 = vunpack.c.l.b16 %v347
    %v491 = vunpack.c.h.b16 %v347
    %v492 = vunpack.c.l.b16 %v348
    %v493 = vunpack.c.h.b16 %v348
    %v494 = vunpack.c.l.b16 %v349
    %v495 = vunpack.c.h.b16 %v349
    %v496 = vunpack.c.l.b16 %v350
    %v497 = vunpack.c.h.b16 %v350
    %v498 = vunpack.c.l.b16 %v351
    %v499 = vunpack.c.h.b16 %v351
    %v500 = vunpack.c.l.b16 %v352
    %v501 = vunpack.c.h.b16 %v352
    %v502 = vunpack.c.l.b16 %v353
    %v503 = vunpack.c.h.b16 %v353
    %v504 = vunpack.c.l.b16 %v354
    %v505 = vunpack.c.h.b16 %v354
    %v506 = vunpack.c.l.b16 %v355
    %v507 = vunpack.c.h.b16 %v355
    %v508 = vunpack.c.l.b16 %v356
    %v509 = vunpack.c.h.b16 %v356
    %v510 = vunpack.c.l.b16 %v357
    %v511 = vunpack.c.h.b16 %v357
    %v512 = vunpack.c.l.b16 %v358
    %v513 = vunpack.c.h.b16 %v358
    %v514 = vunpack.c.l.b16 %v359
    %v515 = vunpack.c.h.b16 %v359
    %v516 = vunpack.c.l.b16 %v360
    %v517 = vunpack.c.h.b16 %v360
    %v518 = vunpack.c.l.b16 %v361
    %v519 = vunpack.c.h.b16 %v361
    %v520 = vunpack.c.l.b16 %v362
    %v521 = vunpack.c.h.b16 %v362
    %v522 = vunpack.c.l.b16 %v363
    %v523 = vunpack.c.h.b16 %v363
    %v524 = vunpack.c.l.b16 %v364
    %v525 = vunpack.c.h.b16 %v364
    %v526 = vunpack.c.l.b16 %v365
    %v527 = vunpack.c.h.b16 %v365
    %v528 = vunpack.c.l.b16 %v366
    %v529 = vunpack.c.h.b16 %v366
    %v530 = vunpack.c.l.b16 %v367
    %v531 = vunpack.c.h.b16 %v367
    %v532 = vunpack.c.l.b16 %v368
    %v533 = vunpack.c.h.b16 %v368
    %v534 = vunpack.c.l.b16 %v369
    %v535 = vunpack.c.h.b16 %v369
    %v536 = vunpack.c.l.b16 %v370
    %v537 = vunpack.c.h.b16 %v370
    %v538 = vunpack.c.l.b16 %v371
    %v539 = vunpack.c.h.b16 %v371
    %v540 = vunpack.c.l.b16 %v372
    %v541 = vunpack.c.h.b16 %v372
    %v542 = vunpack.c.l.b16 %v373
    %v543 = vunpack.c.h.b16 %v373
    %v544 = vunpack.c.l.b16 %v374
    %v545 = vunpack.c.h.b16 %v374
    %v546 = vunpack.c.l.b16 %v375
    %v547 = vunpack.c.h.b16 %v375
    %v548 = vunpack.c.l.b16 %v376
    %v549 = vunpack.c.h.b16 %v376
    %v550 = vunpack.c.l.b16 %v377
    %v551 = vunpack.c.h.b16 %v377
    %v552 = vunpack.c.l.b16 %v378
    %v553 = vunpack.c.h.b16 %v378
    %v554 = vunpack.c.l.b16 %v379
    %v555 = vunpack.c.h.b16 %v379
    %v556 = vunpack.c.l.b16 %v380
    %v557 = vunpack.c.h.b16 %v380
    %v558 = vunpack.c.l.b16 %v381
    %v559 = vunpack.c.h.b16 %v381
    %v560 = vunpack.c.l.b16 %v382
    %v561 = vunpack.c.h.b16 %v382
    %v562 = vunpack.c.l.b16 %v383
    %v563 = vunpack.c.h.b16 %v383
    %v564 = vunpack.c.l.b16 %v384
    %v565 = vunpack.c.h.b16 %v384
    %v566 = vunpack.c.l.b16 %v385
    %v567 = vunpack.c.h.b16 %v385
    %v568 = vunpack.c.l.b16 %v386
    %v569 = vunpack.c.h.b16 %v386
    %v570 = vunpack.c.l.b16 %v387
    %v571 = vunpack.c.h.b16 %v387
    %v572 = vunpack.c.l.b16 %v388
    %v573 = vunpack.c.h.b16 %v388
    %v574 = vunpack.c.l.b16 %v389
    %v575 = vunpack.c.h.b16 %v389
    %v576 = vunpack.c.l.b16 %v390
    %v577 = vunpack.c.h.b16 %v390
    %v578 = vunpack.c.l.b16 %v391
    %v579 = vunpack.c.h.b16 %v391
    %v580 = vunpack.c.l.b16 %v392
    %v581 = vunpack.c.h.b16 %v392
    %v582 = vunpack.c.l.b16 %v393
    %v583 = vunpack.c.h.b16 %v393
    %v584 = vunpack.c.l.b16 %v394
    %v585 = vunpack.c.h.b16 %v394
    %v586 = vunpack.c.l.b16 %v395
    %v587 = vunpack.c.h.b16 %v395
    %v588 = vpack.c.b16 %v464, %v460
    %v589 = vpack.c.b16 %v465, %v461
    %v590 = vpack.c.b16 %v466, %v462
    %v591 = vpack.c.b16 %v467, %v463
    %v592 = vpack.c.b16 %v472, %v468
    %v593 = vpack.c.b16 %v473, %v469
    %v594 = vpack.c.b16 %v474, %v470
    %v595 = vpack.c.b16 %v475, %v471
    %v596 = vpack.c.b16 %v480, %v476
    %v597 = vpack.c.b16 %v481, %v477
    %v598 = vpack.c.b16 %v482, %v478
    %v599 = vpack.c.b16 %v483, %v479
    %v600 = vpack.c.b16 %v488, %v484
    %v601 = vpack.c.b16 %v489, %v485
    %v602 = vpack.c.b16 %v490, %v486
    %v603 = vpack.c.b16 %v491, %v487
    %v604 = vpack.c.b16 %v496, %v492
    %v605 = vpack.c.b16 %v497, %v493
    %v606 = vpack.c.b16 %v498, %v494
    %v607 = vpack.c.b16 %v499, %v495
    %v608 = vpack.c.b16 %v504, %v500
    %v609 = vpack.c.b16 %v505, %v501
    %v610 = vpack.c.b16 %v506, %v502
    %v611 = vpack.c.b16 %v507, %v503
    %v612 = vpack.c.b16 %v512, %v508
    %v613 = vpack.c.b16 %v513, %v509
    %v614 = vpack.c.b16 %v514, %v510
    %v615 = vpack.c.b16 %v515, %v511
    %v616 = vpack.c.b16 %v520, %v516
    %v617 = vpack.c.b16 %v521, %v517
    %v618 = vpack.c.b16 %v522, %v518
    %v619 = vpack.c.b16 %v523, %v519
    %v620 = vpack.c.b16 %v528, %v524
    %v621 = vpack.c.b16 %v529, %v525
    %v622 = vpack.c.b16 %v530, %v526
    %v623 = vpack.c.b16 %v531, %v527
    %v624 = vpack.c.b16 %v536, %v532
    %v625 = vpack.c.b16 %v537, %v533
    %v626 = vpack.c.b16 %v538, %v534
    %v627 = vpack.c.b16 %v539, %v535
    %v628 = vpack.c.b16 %v544, %v540
    %v629 = vpack.c.b16 %v545, %v541
    %v630 = vpack.c.b16 %v546, %v542
    %v631 = vpack.c.b16 %v547, %v543
    %v632 = vpack.c.b16 %v552, %v548
    %v633 = vpack.c.b16 %v553, %v549
    %v634 = vpack.c.b16 %v554, %v550
    %v635 = vpack.c.b16 %v555, %v551
    %v636 = vpack.c.b16 %v560, %v556
    %v637 = vpack.c.b16 %v561, %v557
    %v638 = vpack.c.b16 %v562, %v558
    %v639 = vpack.c.b16 %v563, %v559
    %v640 = vpack.c.b16 %v568, %v564
    %v641 = vpack.c.b16 %v569, %v565
    %v642 = vpack.c.b16 %v570, %v566
    %v643 = vpack.c.b16 %v571, %v567
    %v644 = vpack.c.b16 %v576, %v572
    %v645 = vpack.c.b16 %v577, %v573
    %v646 = vpack.c.b16 %v578, %v574
    %v647 = vpack.c.b16 %v579, %v575
    %v648 = vpack.c.b16 %v584, %v580
    %v649 = vpack.c.b16 %v585, %v581
    %v650 = vpack.c.b16 %v586, %v582
    %v651 = vpack.c.b16 %v587, %v583
    %716 = vmatprep.subr.bf16.mxu0 %v617
    %717 = vmatpush1.bf16.msra.mxu0 %v616
    %718 = vmatprep.subr.bf16.mxu0 %v613
    %719 = vmatpush1.bf16.msra.mxu0 %v612
    %720 = vmatprep.subr.bf16.mxu0 %v609
    %721 = vmatpush1.bf16.msra.mxu0 %v608
    %722 = vmatprep.subr.bf16.mxu0 %v605
    %723 = vmatpush1.bf16.msra.mxu0 %v604
    %724 = vmatprep.subr.bf16.mxu0 %v601
    %725 = vmatpush1.bf16.msra.mxu0 %v600
    %726 = vmatprep.subr.bf16.mxu0 %v597
    %727 = vmatpush1.bf16.msra.mxu0 %v596
    %728 = vmatprep.subr.bf16.mxu0 %v593
    %729 = vmatpush1.bf16.msra.mxu0 %v592
    %730 = vmatprep.subr.bf16.mxu0 %v589
    %731 = vmatpush1.bf16.msra.mxu0 %v588
    %732 = vmatprep.subr.bf16.mxu0 %v649
    %733 = vmatpush2.bf16.msra.mxu0 %v648
    %734 = vmatprep.subr.bf16.mxu0 %v645
    %735 = vmatpush2.bf16.msra.mxu0 %v644
    %736 = vmatprep.subr.bf16.mxu0 %v641
    %737 = vmatpush2.bf16.msra.mxu0 %v640
    %738 = vmatprep.subr.bf16.mxu0 %v637
    %739 = vmatpush2.bf16.msra.mxu0 %v636
    %740 = vmatprep.subr.bf16.mxu0 %v633
    %741 = vmatpush2.bf16.msra.mxu0 %v632
    %742 = vmatprep.subr.bf16.mxu0 %v629
    %743 = vmatpush2.bf16.msra.mxu0 %v628
    %744 = vmatprep.subr.bf16.mxu0 %v625
    %745 = vmatpush2.bf16.msra.mxu0 %v624
    %746 = vmatprep.subr.bf16.mxu0 %v621
    %747 = vmatpush2.bf16.msra.mxu0 %v620
    %748 = vmatprep.mubr.bf16.mxu0 %v325
    %749 = vmatmul.mubr.bf16.gmra.mxu0 %v324
    %v750 = vpop.f32.mrf.mxu0
    %v751 = vadd.f32 0.0, %v750
    %v752 = vpop.f32.mrf.mxu0
    %v753 = vadd.f32 0.0, %v752
    %v754 = vpop.f32.mrf.mxu0
    %v755 = vadd.f32 0.0, %v754
    %v756 = vpop.f32.mrf.mxu0
    %v757 = vadd.f32 0.0, %v756
    %758 = vmatprep.mubr.bf16.mxu0 %v327
    %759 = vmatmul.mubr.bf16.gmra.mxu0 %v326
    %v760 = vpop.f32.mrf.mxu0
    %v761 = vadd.f32 0.0, %v760
    %v762 = vpop.f32.mrf.mxu0
    %v763 = vadd.f32 0.0, %v762
    %v764 = vpop.f32.mrf.mxu0
    %v765 = vadd.f32 0.0, %v764
    %v766 = vpop.f32.mrf.mxu0
    %v767 = vadd.f32 0.0, %v766
    %768 = vmatprep.mubr.bf16.mxu0 %v329
    %769 = vmatmul.mubr.bf16.gmra.mxu0 %v328
    %v770 = vpop.f32.mrf.mxu0
    %v771 = vadd.f32 0.0, %v770
    %v772 = vpop.f32.mrf.mxu0
    %v773 = vadd.f32 0.0, %v772
    %v774 = vpop.f32.mrf.mxu0
    %v775 = vadd.f32 0.0, %v774
    %v776 = vpop.f32.mrf.mxu0
    %v777 = vadd.f32 0.0, %v776
    %778 = vmatprep.mubr.bf16.mxu0 %v331
    %779 = vmatmul.mubr.bf16.gmra.mxu0 %v330
    %v780 = vpop.f32.mrf.mxu0
    %v781 = vadd.f32 0.0, %v780
    %v782 = vpop.f32.mrf.mxu0
    %v783 = vadd.f32 0.0, %v782
    %v784 = vpop.f32.mrf.mxu0
    %v785 = vadd.f32 0.0, %v784
    %v786 = vpop.f32.mrf.mxu0
    %v787 = vadd.f32 0.0, %v786
    %788 = vdwg.mxu0
    %789 = vmatprep.subr.bf16.mxu0 %v619
    %790 = vmatpush1.bf16.msra.mxu0 %v618
    %791 = vmatprep.subr.bf16.mxu0 %v615
    %792 = vmatpush1.bf16.msra.mxu0 %v614
    %793 = vmatprep.subr.bf16.mxu0 %v611
    %794 = vmatpush1.bf16.msra.mxu0 %v610
    %795 = vmatprep.subr.bf16.mxu0 %v607
    %796 = vmatpush1.bf16.msra.mxu0 %v606
    %797 = vmatprep.subr.bf16.mxu0 %v603
    %798 = vmatpush1.bf16.msra.mxu0 %v602
    %799 = vmatprep.subr.bf16.mxu0 %v599
    %800 = vmatpush1.bf16.msra.mxu0 %v598
    %801 = vmatprep.subr.bf16.mxu0 %v595
    %802 = vmatpush1.bf16.msra.mxu0 %v594
    %803 = vmatprep.subr.bf16.mxu0 %v591
    %804 = vmatpush1.bf16.msra.mxu0 %v590
    %805 = vmatprep.subr.bf16.mxu0 %v651
    %806 = vmatpush2.bf16.msra.mxu0 %v650
    %807 = vmatprep.subr.bf16.mxu0 %v647
    %808 = vmatpush2.bf16.msra.mxu0 %v646
    %809 = vmatprep.subr.bf16.mxu0 %v643
    %810 = vmatpush2.bf16.msra.mxu0 %v642
    %811 = vmatprep.subr.bf16.mxu0 %v639
    %812 = vmatpush2.bf16.msra.mxu0 %v638
    %813 = vmatprep.subr.bf16.mxu0 %v635
    %814 = vmatpush2.bf16.msra.mxu0 %v634
    %815 = vmatprep.subr.bf16.mxu0 %v631
    %816 = vmatpush2.bf16.msra.mxu0 %v630
    %817 = vmatprep.subr.bf16.mxu0 %v627
    %818 = vmatpush2.bf16.msra.mxu0 %v626
    %819 = vmatprep.subr.bf16.mxu0 %v623
    %820 = vmatpush2.bf16.msra.mxu0 %v622
    %821 = vmatprep.mubr.bf16.mxu0 %v325
    %822 = vmatmul.mubr.bf16.gmra.mxu0 %v324
    %v823 = vpop.f32.mrf.mxu0
    %v824 = vadd.f32 0.0, %v823
    %v825 = vpop.f32.mrf.mxu0
    %v826 = vadd.f32 0.0, %v825
    %v827 = vpop.f32.mrf.mxu0
    %v828 = vadd.f32 0.0, %v827
    %v829 = vpop.f32.mrf.mxu0
    %v830 = vadd.f32 0.0, %v829
    %831 = vmatprep.mubr.bf16.mxu0 %v327
    %832 = vmatmul.mubr.bf16.gmra.mxu0 %v326
    %v833 = vpop.f32.mrf.mxu0
    %v834 = vadd.f32 0.0, %v833
    %v835 = vpop.f32.mrf.mxu0
    %v836 = vadd.f32 0.0, %v835
    %v837 = vpop.f32.mrf.mxu0
    %v838 = vadd.f32 0.0, %v837
    %v839 = vpop.f32.mrf.mxu0
    %v840 = vadd.f32 0.0, %v839
    %841 = vmatprep.mubr.bf16.mxu0 %v329
    %842 = vmatmul.mubr.bf16.gmra.mxu0 %v328
    %v843 = vpop.f32.mrf.mxu0
    %v844 = vadd.f32 0.0, %v843
    %v845 = vpop.f32.mrf.mxu0
    %v846 = vadd.f32 0.0, %v845
    %v847 = vpop.f32.mrf.mxu0
    %v848 = vadd.f32 0.0, %v847
    %v849 = vpop.f32.mrf.mxu0
    %v850 = vadd.f32 0.0, %v849
    %851 = vmatprep.mubr.bf16.mxu0 %v331
    %852 = vmatmul.mubr.bf16.gmra.mxu0 %v330
    %v853 = vpop.f32.mrf.mxu0
    %v854 = vadd.f32 0.0, %v853
    %v855 = vpop.f32.mrf.mxu0
    %v856 = vadd.f32 0.0, %v855
    %v857 = vpop.f32.mrf.mxu0
    %v858 = vadd.f32 0.0, %v857
    %v859 = vpop.f32.mrf.mxu0
    %v860 = vadd.f32 0.0, %v859
    %861 = vdwg.mxu0
    %v862 = vmax.f32 %v751, 0.0
    %v863 = vmax.f32 %v753, 0.0
    %v864 = vmax.f32 %v824, 0.0
    %v865 = vmax.f32 %v826, 0.0
    %v866 = vmax.f32 %v755, 0.0
    %v867 = vmax.f32 %v757, 0.0
    %v868 = vmax.f32 %v828, 0.0
    %v869 = vmax.f32 %v830, 0.0
    %v870 = vmax.f32 %v761, 0.0
    %v871 = vmax.f32 %v763, 0.0
    %v872 = vmax.f32 %v834, 0.0
    %v873 = vmax.f32 %v836, 0.0
    %v874 = vmax.f32 %v765, 0.0
    %v875 = vmax.f32 %v767, 0.0
    %v876 = vmax.f32 %v838, 0.0
    %v877 = vmax.f32 %v840, 0.0
    %v878 = vmax.f32 %v771, 0.0
    %v879 = vmax.f32 %v773, 0.0
    %v880 = vmax.f32 %v844, 0.0
    %v881 = vmax.f32 %v846, 0.0
    %v882 = vmax.f32 %v775, 0.0
    %v883 = vmax.f32 %v777, 0.0
    %v884 = vmax.f32 %v848, 0.0
    %v885 = vmax.f32 %v850, 0.0
    %v886 = vmax.f32 %v781, 0.0
    %v887 = vmax.f32 %v783, 0.0
    %v888 = vmax.f32 %v854, 0.0
    %v889 = vmax.f32 %v856, 0.0
    %v890 = vmax.f32 %v785, 0.0
    %v891 = vmax.f32 %v787, 0.0
    %v892 = vmax.f32 %v858, 0.0
    %v893 = vmax.f32 %v860, 0.0
    %v894 = vmax.f32 %v862, %v866
    %v895 = vmax.f32 %v863, %v867
    %v896 = vmax.f32 %v864, %v868
    %v897 = vmax.f32 %v865, %v869
    %v898 = vmax.f32 %v894, %v870
    %v899 = vmax.f32 %v895, %v871
    %v900 = vmax.f32 %v896, %v872
    %v901 = vmax.f32 %v897, %v873
    %v902 = vmax.f32 %v898, %v874
    %v903 = vmax.f32 %v899, %v875
    %v904 = vmax.f32 %v900, %v876
    %v905 = vmax.f32 %v901, %v877
    %v906 = vmax.f32 %v902, %v878
    %v907 = vmax.f32 %v903, %v879
    %v908 = vmax.f32 %v904, %v880
    %v909 = vmax.f32 %v905, %v881
    %v910 = vmax.f32 %v906, %v882
    %v911 = vmax.f32 %v907, %v883
    %v912 = vmax.f32 %v908, %v884
    %v913 = vmax.f32 %v909, %v885
    %v914 = vmax.f32 %v910, %v886
    %v915 = vmax.f32 %v911, %v887
    %v916 = vmax.f32 %v912, %v888
    %v917 = vmax.f32 %v913, %v889
    %v918 = vmax.f32 %v914, %v890
    %v919 = vmax.f32 %v915, %v891
    %v920 = vmax.f32 %v916, %v892
    %v921 = vmax.f32 %v917, %v893
    %922 = vst [vmem:[#allocation13] sm:$0xff] %v918
    %923 = vst [vmem:[#allocation13 + $0x8] sm:$0xff] %v919
    %924 = vst [vmem:[#allocation13 + $0x10] sm:$0xff] %v920
    %925 = vst [vmem:[#allocation13 + $0x18] sm:$0xff] %v921
    %v926 = vld [vmem:[#allocation5] sm:$0xf]
    %v927 = vld [vmem:[#allocation5 + $0x4] sm:$0xf]
    %v928 = vld [vmem:[#allocation5 + $0x8] sm:$0xf]
    %v929 = vld [vmem:[#allocation5 + $0xc] sm:$0xf]
    %v930 = vld [vmem:[#allocation5 + $0x10] sm:$0xf]
    %v931 = vld [vmem:[#allocation5 + $0x14] sm:$0xf]
    %v932 = vld [vmem:[#allocation5 + $0x18] sm:$0xf]
    %v933 = vld [vmem:[#allocation5 + $0x1c] sm:$0xf]
    %v934 = vld [vmem:[#allocation5 + $0x20] sm:$0xf]
    %v935 = vld [vmem:[#allocation5 + $0x24] sm:$0xf]
    %v936 = vld [vmem:[#allocation5 + $0x28] sm:$0xf]
    %v937 = vld [vmem:[#allocation5 + $0x2c] sm:$0xf]
    %v938 = vld [vmem:[#allocation5 + $0x30] sm:$0xf]
    %v939 = vld [vmem:[#allocation5 + $0x34] sm:$0xf]
    %v940 = vld [vmem:[#allocation5 + $0x38] sm:$0xf]
    %v941 = vld [vmem:[#allocation5 + $0x3c] sm:$0xf]
    %v942 = vld [vmem:[#allocation10] sm:$0xff]
    %v943 = vld [vmem:[#allocation10 + $0x8] sm:$0xff]
    %v944 = vld [vmem:[#allocation10 + $0x10] sm:$0xff]
    %v945 = vld [vmem:[#allocation10 + $0x18] sm:$0xff]
    %v946 = vld [vmem:[#allocation10 + $0x20] sm:$0xff]
    %v947 = vld [vmem:[#allocation10 + $0x28] sm:$0xff]
    %v948 = vld [vmem:[#allocation10 + $0x30] sm:$0xff]
    %v949 = vld [vmem:[#allocation10 + $0x38] sm:$0xff]
    %v950 = vld [vmem:[#allocation10 + $0x40] sm:$0xff]
    %v951 = vld [vmem:[#allocation10 + $0x48] sm:$0xff]
    %v952 = vld [vmem:[#allocation10 + $0x50] sm:$0xff]
    %v953 = vld [vmem:[#allocation10 + $0x58] sm:$0xff]
    %v954 = vld [vmem:[#allocation10 + $0x60] sm:$0xff]
    %v955 = vld [vmem:[#allocation10 + $0x68] sm:$0xff]
    %v956 = vld [vmem:[#allocation10 + $0x70] sm:$0xff]
    %v957 = vld [vmem:[#allocation10 + $0x78] sm:$0xff]
    %v974 = vunpack.c.l.b16 %v926
    %v975 = vunpack.c.l.b16 %v927
    %v976 = vunpack.c.l.b16 %v928
    %v977 = vunpack.c.l.b16 %v929
    %v978 = vunpack.c.l.b16 %v930
    %v979 = vunpack.c.l.b16 %v931
    %v980 = vunpack.c.l.b16 %v932
    %v981 = vunpack.c.l.b16 %v933
    %v982 = vunpack.c.l.b16 %v934
    %v983 = vunpack.c.l.b16 %v935
    %v984 = vunpack.c.l.b16 %v936
    %v985 = vunpack.c.l.b16 %v937
    %v986 = vunpack.c.l.b16 %v938
    %v987 = vunpack.c.l.b16 %v939
    %v988 = vunpack.c.l.b16 %v940
    %v989 = vunpack.c.l.b16 %v941
    %v990 = vpack.c.b16 %v975, %v974
    %v991 = vpack.c.b16 %v977, %v976
    %v992 = vpack.c.b16 %v979, %v978
    %v993 = vpack.c.b16 %v981, %v980
    %v994 = vpack.c.b16 %v983, %v982
    %v995 = vpack.c.b16 %v985, %v984
    %v996 = vpack.c.b16 %v987, %v986
    %v997 = vpack.c.b16 %v989, %v988
    %v1022 = vunpack.c.l.b16 %v942
    %v1023 = vunpack.c.h.b16 %v942
    %v1024 = vunpack.c.l.b16 %v943
    %v1025 = vunpack.c.h.b16 %v943
    %v1026 = vunpack.c.l.b16 %v944
    %v1027 = vunpack.c.h.b16 %v944
    %v1028 = vunpack.c.l.b16 %v945
    %v1029 = vunpack.c.h.b16 %v945
    %v1030 = vunpack.c.l.b16 %v946
    %v1031 = vunpack.c.h.b16 %v946
    %v1032 = vunpack.c.l.b16 %v947
    %v1033 = vunpack.c.h.b16 %v947
    %v1034 = vunpack.c.l.b16 %v948
    %v1035 = vunpack.c.h.b16 %v948
    %v1036 = vunpack.c.l.b16 %v949
    %v1037 = vunpack.c.h.b16 %v949
    %v1038 = vunpack.c.l.b16 %v950
    %v1039 = vunpack.c.h.b16 %v950
    %v1040 = vunpack.c.l.b16 %v951
    %v1041 = vunpack.c.h.b16 %v951
    %v1042 = vunpack.c.l.b16 %v952
    %v1043 = vunpack.c.h.b16 %v952
    %v1044 = vunpack.c.l.b16 %v953
    %v1045 = vunpack.c.h.b16 %v953
    %v1046 = vunpack.c.l.b16 %v954
    %v1047 = vunpack.c.h.b16 %v954
    %v1048 = vunpack.c.l.b16 %v955
    %v1049 = vunpack.c.h.b16 %v955
    %v1050 = vunpack.c.l.b16 %v956
    %v1051 = vunpack.c.h.b16 %v956
    %v1052 = vunpack.c.l.b16 %v957
    %v1053 = vunpack.c.h.b16 %v957
    %v1054 = vpack.c.b16 %v1024, %v1022
    %v1055 = vpack.c.b16 %v1025, %v1023
    %v1056 = vpack.c.b16 %v1028, %v1026
    %v1057 = vpack.c.b16 %v1029, %v1027
    %v1058 = vpack.c.b16 %v1032, %v1030
    %v1059 = vpack.c.b16 %v1033, %v1031
    %v1060 = vpack.c.b16 %v1036, %v1034
    %v1061 = vpack.c.b16 %v1037, %v1035
    %v1062 = vpack.c.b16 %v1040, %v1038
    %v1063 = vpack.c.b16 %v1041, %v1039
    %v1064 = vpack.c.b16 %v1044, %v1042
    %v1065 = vpack.c.b16 %v1045, %v1043
    %v1066 = vpack.c.b16 %v1048, %v1046
    %v1067 = vpack.c.b16 %v1049, %v1047
    %v1068 = vpack.c.b16 %v1052, %v1050
    %v1069 = vpack.c.b16 %v1053, %v1051
    %1086 = vmatprep.subr.bf16.mxu0 %v1069
    %1087 = vmatpush1.bf16.msra.mxu0 %v1068
    %1088 = vmatprep.subr.bf16.mxu0 %v1067
    %1089 = vmatpush1.bf16.msra.mxu0 %v1066
    %1090 = vmatprep.subr.bf16.mxu0 %v1065
    %1091 = vmatpush1.bf16.msra.mxu0 %v1064
    %1092 = vmatprep.subr.bf16.mxu0 %v1063
    %1093 = vmatpush1.bf16.msra.mxu0 %v1062
    %1094 = vmatprep.subr.bf16.mxu0 %v1061
    %1095 = vmatpush1.bf16.msra.mxu0 %v1060
    %1096 = vmatprep.subr.bf16.mxu0 %v1059
    %1097 = vmatpush1.bf16.msra.mxu0 %v1058
    %1098 = vmatprep.subr.bf16.mxu0 %v1057
    %1099 = vmatpush1.bf16.msra.mxu0 %v1056
    %1100 = vmatprep.subr.bf16.mxu0 %v1055
    %1101 = vmatpush1.bf16.msra.mxu0 %v1054
    %1102 = vmatprep.subr.bf16.mxu0 0
    %1103 = vmatpush2.bf16.msra.mxu0 0
    %1104 = vmatprep.subr.bf16.mxu0 0
    %1105 = vmatpush2.bf16.msra.mxu0 0
    %1106 = vmatprep.subr.bf16.mxu0 0
    %1107 = vmatpush2.bf16.msra.mxu0 0
    %1108 = vmatprep.subr.bf16.mxu0 0
    %1109 = vmatpush2.bf16.msra.mxu0 0
    %1110 = vmatprep.subr.bf16.mxu0 0
    %1111 = vmatpush2.bf16.msra.mxu0 0
    %1112 = vmatprep.subr.bf16.mxu0 0
    %1113 = vmatpush2.bf16.msra.mxu0 0
    %1114 = vmatprep.subr.bf16.mxu0 0
    %1115 = vmatpush2.bf16.msra.mxu0 0
    %1116 = vmatprep.subr.bf16.mxu0 0
    %1117 = vmatpush2.bf16.msra.mxu0 0
    %1118 = vmatprep.mubr.bf16.mxu0 0
    %1119 = vmatmul.mubr.bf16.gmra.mxu0 %v990
    %v1120 = vpop.f32.mrf.mxu0
    %v1121 = vadd.f32 0.0, %v1120
    %v1122 = vpop.f32.mrf.mxu0
    %v1123 = vadd.f32 0.0, %v1122
    %v1124 = vpop.f32.mrf.mxu0
    %v1125 = vadd.f32 0.0, %v1124
    %v1126 = vpop.f32.mrf.mxu0
    %v1127 = vadd.f32 0.0, %v1126
    %1128 = vmatprep.mubr.bf16.mxu0 0
    %1129 = vmatmul.mubr.bf16.gmra.mxu0 %v991
    %v1130 = vpop.f32.mrf.mxu0
    %v1131 = vadd.f32 0.0, %v1130
    %v1132 = vpop.f32.mrf.mxu0
    %v1133 = vadd.f32 0.0, %v1132
    %v1134 = vpop.f32.mrf.mxu0
    %v1135 = vadd.f32 0.0, %v1134
    %v1136 = vpop.f32.mrf.mxu0
    %v1137 = vadd.f32 0.0, %v1136
    %1138 = vmatprep.mubr.bf16.mxu0 0
    %1139 = vmatmul.mubr.bf16.gmra.mxu0 %v992
    %v1140 = vpop.f32.mrf.mxu0
    %v1141 = vadd.f32 0.0, %v1140
    %v1142 = vpop.f32.mrf.mxu0
    %v1143 = vadd.f32 0.0, %v1142
    %v1144 = vpop.f32.mrf.mxu0
    %v1145 = vadd.f32 0.0, %v1144
    %v1146 = vpop.f32.mrf.mxu0
    %v1147 = vadd.f32 0.0, %v1146
    %1148 = vmatprep.mubr.bf16.mxu0 0
    %1149 = vmatmul.mubr.bf16.gmra.mxu0 %v993
    %v1150 = vpop.f32.mrf.mxu0
    %v1151 = vadd.f32 0.0, %v1150
    %v1152 = vpop.f32.mrf.mxu0
    %v1153 = vadd.f32 0.0, %v1152
    %v1154 = vpop.f32.mrf.mxu0
    %v1155 = vadd.f32 0.0, %v1154
    %v1156 = vpop.f32.mrf.mxu0
    %v1157 = vadd.f32 0.0, %v1156
    %1158 = vmatprep.mubr.bf16.mxu0 0
    %1159 = vmatmul.mubr.bf16.gmra.mxu0 %v994
    %v1160 = vpop.f32.mrf.mxu0
    %v1161 = vadd.f32 0.0, %v1160
    %v1162 = vpop.f32.mrf.mxu0
    %v1163 = vadd.f32 0.0, %v1162
    %v1164 = vpop.f32.mrf.mxu0
    %v1165 = vadd.f32 0.0, %v1164
    %v1166 = vpop.f32.mrf.mxu0
    %v1167 = vadd.f32 0.0, %v1166
    %1168 = vmatprep.mubr.bf16.mxu0 0
    %1169 = vmatmul.mubr.bf16.gmra.mxu0 %v995
    %v1170 = vpop.f32.mrf.mxu0
    %v1171 = vadd.f32 0.0, %v1170
    %v1172 = vpop.f32.mrf.mxu0
    %v1173 = vadd.f32 0.0, %v1172
    %v1174 = vpop.f32.mrf.mxu0
    %v1175 = vadd.f32 0.0, %v1174
    %v1176 = vpop.f32.mrf.mxu0
    %v1177 = vadd.f32 0.0, %v1176
    %1178 = vmatprep.mubr.bf16.mxu0 0
    %1179 = vmatmul.mubr.bf16.gmra.mxu0 %v996
    %v1180 = vpop.f32.mrf.mxu0
    %v1181 = vadd.f32 0.0, %v1180
    %v1182 = vpop.f32.mrf.mxu0
    %v1183 = vadd.f32 0.0, %v1182
    %v1184 = vpop.f32.mrf.mxu0
    %v1185 = vadd.f32 0.0, %v1184
    %v1186 = vpop.f32.mrf.mxu0
    %v1187 = vadd.f32 0.0, %v1186
    %1188 = vmatprep.mubr.bf16.mxu0 0
    %1189 = vmatmul.mubr.bf16.gmra.mxu0 %v997
    %v1190 = vpop.f32.mrf.mxu0
    %v1191 = vadd.f32 0.0, %v1190
    %v1192 = vpop.f32.mrf.mxu0
    %v1193 = vadd.f32 0.0, %v1192
    %v1194 = vpop.f32.mrf.mxu0
    %v1195 = vadd.f32 0.0, %v1194
    %v1196 = vpop.f32.mrf.mxu0
    %v1197 = vadd.f32 0.0, %v1196
    %1198 = vdwg.mxu0
    %v1199 = vmax.f32 %v1121, 0.0
    %v1200 = vmax.f32 %v1123, 0.0
    %v1201 = vmax.f32 %v1125, 0.0
    %v1202 = vmax.f32 %v1127, 0.0
    %v1203 = vmax.f32 %v1131, 0.0
    %v1204 = vmax.f32 %v1133, 0.0
    %v1205 = vmax.f32 %v1135, 0.0
    %v1206 = vmax.f32 %v1137, 0.0
    %v1207 = vmax.f32 %v1141, 0.0
    %v1208 = vmax.f32 %v1143, 0.0
    %v1209 = vmax.f32 %v1145, 0.0
    %v1210 = vmax.f32 %v1147, 0.0
    %v1211 = vmax.f32 %v1151, 0.0
    %v1212 = vmax.f32 %v1153, 0.0
    %v1213 = vmax.f32 %v1155, 0.0
    %v1214 = vmax.f32 %v1157, 0.0
    %v1215 = vmax.f32 %v1161, 0.0
    %v1216 = vmax.f32 %v1163, 0.0
    %v1217 = vmax.f32 %v1165, 0.0
    %v1218 = vmax.f32 %v1167, 0.0
    %v1219 = vmax.f32 %v1171, 0.0
    %v1220 = vmax.f32 %v1173, 0.0
    %v1221 = vmax.f32 %v1175, 0.0
    %v1222 = vmax.f32 %v1177, 0.0
    %v1223 = vmax.f32 %v1181, 0.0
    %v1224 = vmax.f32 %v1183, 0.0
    %v1225 = vmax.f32 %v1185, 0.0
    %v1226 = vmax.f32 %v1187, 0.0
    %v1227 = vmax.f32 %v1191, 0.0
    %v1228 = vmax.f32 %v1193, 0.0
    %v1229 = vmax.f32 %v1195, 0.0
    %v1230 = vmax.f32 %v1197, 0.0
    %v1231 = vpack.c.bf16 %v1201, %v1199
    %v1232 = vpack.c.bf16 %v1202, %v1200
    %v1233 = vpack.c.bf16 %v1205, %v1203
    %v1234 = vpack.c.bf16 %v1206, %v1204
    %v1235 = vpack.c.bf16 %v1209, %v1207
    %v1236 = vpack.c.bf16 %v1210, %v1208
    %v1237 = vpack.c.bf16 %v1213, %v1211
    %v1238 = vpack.c.bf16 %v1214, %v1212
    %v1239 = vpack.c.bf16 %v1217, %v1215
    %v1240 = vpack.c.bf16 %v1218, %v1216
    %v1241 = vpack.c.bf16 %v1221, %v1219
    %v1242 = vpack.c.bf16 %v1222, %v1220
    %v1243 = vpack.c.bf16 %v1225, %v1223
    %v1244 = vpack.c.bf16 %v1226, %v1224
    %v1245 = vpack.c.bf16 %v1229, %v1227
    %v1246 = vpack.c.bf16 %v1230, %v1228
    %v1247 = vld [vmem:[#allocation11] sm:$0xff]
    %v1248 = vld [vmem:[#allocation11 + $0x8] sm:$0xff]
    %v1249 = vld [vmem:[#allocation11 + $0x10] sm:$0xff]
    %v1250 = vld [vmem:[#allocation11 + $0x18] sm:$0xff]
    %v1251 = vld [vmem:[#allocation11 + $0x20] sm:$0xff]
    %v1252 = vld [vmem:[#allocation11 + $0x28] sm:$0xff]
    %v1253 = vld [vmem:[#allocation11 + $0x30] sm:$0xff]
    %v1254 = vld [vmem:[#allocation11 + $0x38] sm:$0xff]
    %v1255 = vld [vmem:[#allocation11 + $0x40] sm:$0xff]
    %v1256 = vld [vmem:[#allocation11 + $0x48] sm:$0xff]
    %v1257 = vld [vmem:[#allocation11 + $0x50] sm:$0xff]
    %v1258 = vld [vmem:[#allocation11 + $0x58] sm:$0xff]
    %v1259 = vld [vmem:[#allocation11 + $0x60] sm:$0xff]
    %v1260 = vld [vmem:[#allocation11 + $0x68] sm:$0xff]
    %v1261 = vld [vmem:[#allocation11 + $0x70] sm:$0xff]
    %v1262 = vld [vmem:[#allocation11 + $0x78] sm:$0xff]
    %v1263 = vld [vmem:[#allocation11 + $0x80] sm:$0xff]
    %v1264 = vld [vmem:[#allocation11 + $0x88] sm:$0xff]
    %v1265 = vld [vmem:[#allocation11 + $0x90] sm:$0xff]
    %v1266 = vld [vmem:[#allocation11 + $0x98] sm:$0xff]
    %v1267 = vld [vmem:[#allocation11 + $0xa0] sm:$0xff]
    %v1268 = vld [vmem:[#allocation11 + $0xa8] sm:$0xff]
    %v1269 = vld [vmem:[#allocation11 + $0xb0] sm:$0xff]
    %v1270 = vld [vmem:[#allocation11 + $0xb8] sm:$0xff]
    %v1271 = vld [vmem:[#allocation11 + $0xc0] sm:$0xff]
    %v1272 = vld [vmem:[#allocation11 + $0xc8] sm:$0xff]
    %v1273 = vld [vmem:[#allocation11 + $0xd0] sm:$0xff]
    %v1274 = vld [vmem:[#allocation11 + $0xd8] sm:$0xff]
    %v1275 = vld [vmem:[#allocation11 + $0xe0] sm:$0xff]
    %v1276 = vld [vmem:[#allocation11 + $0xe8] sm:$0xff]
    %v1277 = vld [vmem:[#allocation11 + $0xf0] sm:$0xff]
    %v1278 = vld [vmem:[#allocation11 + $0xf8] sm:$0xff]
    %v1279 = vld [vmem:[#allocation11 + $0x100] sm:$0xff]
    %v1280 = vld [vmem:[#allocation11 + $0x108] sm:$0xff]
    %v1281 = vld [vmem:[#allocation11 + $0x110] sm:$0xff]
    %v1282 = vld [vmem:[#allocation11 + $0x118] sm:$0xff]
    %v1283 = vld [vmem:[#allocation11 + $0x120] sm:$0xff]
    %v1284 = vld [vmem:[#allocation11 + $0x128] sm:$0xff]
    %v1285 = vld [vmem:[#allocation11 + $0x130] sm:$0xff]
    %v1286 = vld [vmem:[#allocation11 + $0x138] sm:$0xff]
    %v1287 = vld [vmem:[#allocation11 + $0x140] sm:$0xff]
    %v1288 = vld [vmem:[#allocation11 + $0x148] sm:$0xff]
    %v1289 = vld [vmem:[#allocation11 + $0x150] sm:$0xff]
    %v1290 = vld [vmem:[#allocation11 + $0x158] sm:$0xff]
    %v1291 = vld [vmem:[#allocation11 + $0x160] sm:$0xff]
    %v1292 = vld [vmem:[#allocation11 + $0x168] sm:$0xff]
    %v1293 = vld [vmem:[#allocation11 + $0x170] sm:$0xff]
    %v1294 = vld [vmem:[#allocation11 + $0x178] sm:$0xff]
    %v1295 = vld [vmem:[#allocation11 + $0x180] sm:$0xff]
    %v1296 = vld [vmem:[#allocation11 + $0x188] sm:$0xff]
    %v1297 = vld [vmem:[#allocation11 + $0x190] sm:$0xff]
    %v1298 = vld [vmem:[#allocation11 + $0x198] sm:$0xff]
    %v1299 = vld [vmem:[#allocation11 + $0x1a0] sm:$0xff]
    %v1300 = vld [vmem:[#allocation11 + $0x1a8] sm:$0xff]
    %v1301 = vld [vmem:[#allocation11 + $0x1b0] sm:$0xff]
    %v1302 = vld [vmem:[#allocation11 + $0x1b8] sm:$0xff]
    %v1303 = vld [vmem:[#allocation11 + $0x1c0] sm:$0xff]
    %v1304 = vld [vmem:[#allocation11 + $0x1c8] sm:$0xff]
    %v1305 = vld [vmem:[#allocation11 + $0x1d0] sm:$0xff]
    %v1306 = vld [vmem:[#allocation11 + $0x1d8] sm:$0xff]
    %v1307 = vld [vmem:[#allocation11 + $0x1e0] sm:$0xff]
    %v1308 = vld [vmem:[#allocation11 + $0x1e8] sm:$0xff]
    %v1309 = vld [vmem:[#allocation11 + $0x1f0] sm:$0xff]
    %v1310 = vld [vmem:[#allocation11 + $0x1f8] sm:$0xff]
    %v1375 = vunpack.c.l.b16 %v1247
    %v1376 = vunpack.c.h.b16 %v1247
    %v1377 = vunpack.c.l.b16 %v1248
    %v1378 = vunpack.c.h.b16 %v1248
    %v1379 = vunpack.c.l.b16 %v1249
    %v1380 = vunpack.c.h.b16 %v1249
    %v1381 = vunpack.c.l.b16 %v1250
    %v1382 = vunpack.c.h.b16 %v1250
    %v1383 = vunpack.c.l.b16 %v1251
    %v1384 = vunpack.c.h.b16 %v1251
    %v1385 = vunpack.c.l.b16 %v1252
    %v1386 = vunpack.c.h.b16 %v1252
    %v1387 = vunpack.c.l.b16 %v1253
    %v1388 = vunpack.c.h.b16 %v1253
    %v1389 = vunpack.c.l.b16 %v1254
    %v1390 = vunpack.c.h.b16 %v1254
    %v1391 = vunpack.c.l.b16 %v1255
    %v1392 = vunpack.c.h.b16 %v1255
    %v1393 = vunpack.c.l.b16 %v1256
    %v1394 = vunpack.c.h.b16 %v1256
    %v1395 = vunpack.c.l.b16 %v1257
    %v1396 = vunpack.c.h.b16 %v1257
    %v1397 = vunpack.c.l.b16 %v1258
    %v1398 = vunpack.c.h.b16 %v1258
    %v1399 = vunpack.c.l.b16 %v1259
    %v1400 = vunpack.c.h.b16 %v1259
    %v1401 = vunpack.c.l.b16 %v1260
    %v1402 = vunpack.c.h.b16 %v1260
    %v1403 = vunpack.c.l.b16 %v1261
    %v1404 = vunpack.c.h.b16 %v1261
    %v1405 = vunpack.c.l.b16 %v1262
    %v1406 = vunpack.c.h.b16 %v1262
    %v1407 = vunpack.c.l.b16 %v1263
    %v1408 = vunpack.c.h.b16 %v1263
    %v1409 = vunpack.c.l.b16 %v1264
    %v1410 = vunpack.c.h.b16 %v1264
    %v1411 = vunpack.c.l.b16 %v1265
    %v1412 = vunpack.c.h.b16 %v1265
    %v1413 = vunpack.c.l.b16 %v1266
    %v1414 = vunpack.c.h.b16 %v1266
    %v1415 = vunpack.c.l.b16 %v1267
    %v1416 = vunpack.c.h.b16 %v1267
    %v1417 = vunpack.c.l.b16 %v1268
    %v1418 = vunpack.c.h.b16 %v1268
    %v1419 = vunpack.c.l.b16 %v1269
    %v1420 = vunpack.c.h.b16 %v1269
    %v1421 = vunpack.c.l.b16 %v1270
    %v1422 = vunpack.c.h.b16 %v1270
    %v1423 = vunpack.c.l.b16 %v1271
    %v1424 = vunpack.c.h.b16 %v1271
    %v1425 = vunpack.c.l.b16 %v1272
    %v1426 = vunpack.c.h.b16 %v1272
    %v1427 = vunpack.c.l.b16 %v1273
    %v1428 = vunpack.c.h.b16 %v1273
    %v1429 = vunpack.c.l.b16 %v1274
    %v1430 = vunpack.c.h.b16 %v1274
    %v1431 = vunpack.c.l.b16 %v1275
    %v1432 = vunpack.c.h.b16 %v1275
    %v1433 = vunpack.c.l.b16 %v1276
    %v1434 = vunpack.c.h.b16 %v1276
    %v1435 = vunpack.c.l.b16 %v1277
    %v1436 = vunpack.c.h.b16 %v1277
    %v1437 = vunpack.c.l.b16 %v1278
    %v1438 = vunpack.c.h.b16 %v1278
    %v1439 = vunpack.c.l.b16 %v1279
    %v1440 = vunpack.c.h.b16 %v1279
    %v1441 = vunpack.c.l.b16 %v1280
    %v1442 = vunpack.c.h.b16 %v1280
    %v1443 = vunpack.c.l.b16 %v1281
    %v1444 = vunpack.c.h.b16 %v1281
    %v1445 = vunpack.c.l.b16 %v1282
    %v1446 = vunpack.c.h.b16 %v1282
    %v1447 = vunpack.c.l.b16 %v1283
    %v1448 = vunpack.c.h.b16 %v1283
    %v1449 = vunpack.c.l.b16 %v1284
    %v1450 = vunpack.c.h.b16 %v1284
    %v1451 = vunpack.c.l.b16 %v1285
    %v1452 = vunpack.c.h.b16 %v1285
    %v1453 = vunpack.c.l.b16 %v1286
    %v1454 = vunpack.c.h.b16 %v1286
    %v1455 = vunpack.c.l.b16 %v1287
    %v1456 = vunpack.c.h.b16 %v1287
    %v1457 = vunpack.c.l.b16 %v1288
    %v1458 = vunpack.c.h.b16 %v1288
    %v1459 = vunpack.c.l.b16 %v1289
    %v1460 = vunpack.c.h.b16 %v1289
    %v1461 = vunpack.c.l.b16 %v1290
    %v1462 = vunpack.c.h.b16 %v1290
    %v1463 = vunpack.c.l.b16 %v1291
    %v1464 = vunpack.c.h.b16 %v1291
    %v1465 = vunpack.c.l.b16 %v1292
    %v1466 = vunpack.c.h.b16 %v1292
    %v1467 = vunpack.c.l.b16 %v1293
    %v1468 = vunpack.c.h.b16 %v1293
    %v1469 = vunpack.c.l.b16 %v1294
    %v1470 = vunpack.c.h.b16 %v1294
    %v1471 = vunpack.c.l.b16 %v1295
    %v1472 = vunpack.c.h.b16 %v1295
    %v1473 = vunpack.c.l.b16 %v1296
    %v1474 = vunpack.c.h.b16 %v1296
    %v1475 = vunpack.c.l.b16 %v1297
    %v1476 = vunpack.c.h.b16 %v1297
    %v1477 = vunpack.c.l.b16 %v1298
    %v1478 = vunpack.c.h.b16 %v1298
    %v1479 = vunpack.c.l.b16 %v1299
    %v1480 = vunpack.c.h.b16 %v1299
    %v1481 = vunpack.c.l.b16 %v1300
    %v1482 = vunpack.c.h.b16 %v1300
    %v1483 = vunpack.c.l.b16 %v1301
    %v1484 = vunpack.c.h.b16 %v1301
    %v1485 = vunpack.c.l.b16 %v1302
    %v1486 = vunpack.c.h.b16 %v1302
    %v1487 = vunpack.c.l.b16 %v1303
    %v1488 = vunpack.c.h.b16 %v1303
    %v1489 = vunpack.c.l.b16 %v1304
    %v1490 = vunpack.c.h.b16 %v1304
    %v1491 = vunpack.c.l.b16 %v1305
    %v1492 = vunpack.c.h.b16 %v1305
    %v1493 = vunpack.c.l.b16 %v1306
    %v1494 = vunpack.c.h.b16 %v1306
    %v1495 = vunpack.c.l.b16 %v1307
    %v1496 = vunpack.c.h.b16 %v1307
    %v1497 = vunpack.c.l.b16 %v1308
    %v1498 = vunpack.c.h.b16 %v1308
    %v1499 = vunpack.c.l.b16 %v1309
    %v1500 = vunpack.c.h.b16 %v1309
    %v1501 = vunpack.c.l.b16 %v1310
    %v1502 = vunpack.c.h.b16 %v1310
    %v1503 = vpack.c.b16 %v1379, %v1375
    %v1504 = vpack.c.b16 %v1380, %v1376
    %v1505 = vpack.c.b16 %v1381, %v1377
    %v1506 = vpack.c.b16 %v1382, %v1378
    %v1507 = vpack.c.b16 %v1387, %v1383
    %v1508 = vpack.c.b16 %v1388, %v1384
    %v1509 = vpack.c.b16 %v1389, %v1385
    %v1510 = vpack.c.b16 %v1390, %v1386
    %v1511 = vpack.c.b16 %v1395, %v1391
    %v1512 = vpack.c.b16 %v1396, %v1392
    %v1513 = vpack.c.b16 %v1397, %v1393
    %v1514 = vpack.c.b16 %v1398, %v1394
    %v1515 = vpack.c.b16 %v1403, %v1399
    %v1516 = vpack.c.b16 %v1404, %v1400
    %v1517 = vpack.c.b16 %v1405, %v1401
    %v1518 = vpack.c.b16 %v1406, %v1402
    %v1519 = vpack.c.b16 %v1411, %v1407
    %v1520 = vpack.c.b16 %v1412, %v1408
    %v1521 = vpack.c.b16 %v1413, %v1409
    %v1522 = vpack.c.b16 %v1414, %v1410
    %v1523 = vpack.c.b16 %v1419, %v1415
    %v1524 = vpack.c.b16 %v1420, %v1416
    %v1525 = vpack.c.b16 %v1421, %v1417
    %v1526 = vpack.c.b16 %v1422, %v1418
    %v1527 = vpack.c.b16 %v1427, %v1423
    %v1528 = vpack.c.b16 %v1428, %v1424
    %v1529 = vpack.c.b16 %v1429, %v1425
    %v1530 = vpack.c.b16 %v1430, %v1426
    %v1531 = vpack.c.b16 %v1435, %v1431
    %v1532 = vpack.c.b16 %v1436, %v1432
    %v1533 = vpack.c.b16 %v1437, %v1433
    %v1534 = vpack.c.b16 %v1438, %v1434
    %v1535 = vpack.c.b16 %v1443, %v1439
    %v1536 = vpack.c.b16 %v1444, %v1440
    %v1537 = vpack.c.b16 %v1445, %v1441
    %v1538 = vpack.c.b16 %v1446, %v1442
    %v1539 = vpack.c.b16 %v1451, %v1447
    %v1540 = vpack.c.b16 %v1452, %v1448
    %v1541 = vpack.c.b16 %v1453, %v1449
    %v1542 = vpack.c.b16 %v1454, %v1450
    %v1543 = vpack.c.b16 %v1459, %v1455
    %v1544 = vpack.c.b16 %v1460, %v1456
    %v1545 = vpack.c.b16 %v1461, %v1457
    %v1546 = vpack.c.b16 %v1462, %v1458
    %v1547 = vpack.c.b16 %v1467, %v1463
    %v1548 = vpack.c.b16 %v1468, %v1464
    %v1549 = vpack.c.b16 %v1469, %v1465
    %v1550 = vpack.c.b16 %v1470, %v1466
    %v1551 = vpack.c.b16 %v1475, %v1471
    %v1552 = vpack.c.b16 %v1476, %v1472
    %v1553 = vpack.c.b16 %v1477, %v1473
    %v1554 = vpack.c.b16 %v1478, %v1474
    %v1555 = vpack.c.b16 %v1483, %v1479
    %v1556 = vpack.c.b16 %v1484, %v1480
    %v1557 = vpack.c.b16 %v1485, %v1481
    %v1558 = vpack.c.b16 %v1486, %v1482
    %v1559 = vpack.c.b16 %v1491, %v1487
    %v1560 = vpack.c.b16 %v1492, %v1488
    %v1561 = vpack.c.b16 %v1493, %v1489
    %v1562 = vpack.c.b16 %v1494, %v1490
    %v1563 = vpack.c.b16 %v1499, %v1495
    %v1564 = vpack.c.b16 %v1500, %v1496
    %v1565 = vpack.c.b16 %v1501, %v1497
    %v1566 = vpack.c.b16 %v1502, %v1498
    %1631 = vmatprep.subr.bf16.mxu0 %v1532
    %1632 = vmatpush1.bf16.msra.mxu0 %v1531
    %1633 = vmatprep.subr.bf16.mxu0 %v1528
    %1634 = vmatpush1.bf16.msra.mxu0 %v1527
    %1635 = vmatprep.subr.bf16.mxu0 %v1524
    %1636 = vmatpush1.bf16.msra.mxu0 %v1523
    %1637 = vmatprep.subr.bf16.mxu0 %v1520
    %1638 = vmatpush1.bf16.msra.mxu0 %v1519
    %1639 = vmatprep.subr.bf16.mxu0 %v1516
    %1640 = vmatpush1.bf16.msra.mxu0 %v1515
    %1641 = vmatprep.subr.bf16.mxu0 %v1512
    %1642 = vmatpush1.bf16.msra.mxu0 %v1511
    %1643 = vmatprep.subr.bf16.mxu0 %v1508
    %1644 = vmatpush1.bf16.msra.mxu0 %v1507
    %1645 = vmatprep.subr.bf16.mxu0 %v1504
    %1646 = vmatpush1.bf16.msra.mxu0 %v1503
    %1647 = vmatprep.subr.bf16.mxu0 %v1564
    %1648 = vmatpush2.bf16.msra.mxu0 %v1563
    %1649 = vmatprep.subr.bf16.mxu0 %v1560
    %1650 = vmatpush2.bf16.msra.mxu0 %v1559
    %1651 = vmatprep.subr.bf16.mxu0 %v1556
    %1652 = vmatpush2.bf16.msra.mxu0 %v1555
    %1653 = vmatprep.subr.bf16.mxu0 %v1552
    %1654 = vmatpush2.bf16.msra.mxu0 %v1551
    %1655 = vmatprep.subr.bf16.mxu0 %v1548
    %1656 = vmatpush2.bf16.msra.mxu0 %v1547
    %1657 = vmatprep.subr.bf16.mxu0 %v1544
    %1658 = vmatpush2.bf16.msra.mxu0 %v1543
    %1659 = vmatprep.subr.bf16.mxu0 %v1540
    %1660 = vmatpush2.bf16.msra.mxu0 %v1539
    %1661 = vmatprep.subr.bf16.mxu0 %v1536
    %1662 = vmatpush2.bf16.msra.mxu0 %v1535
    %1663 = vmatprep.mubr.bf16.mxu0 %v1232
    %1664 = vmatmul.mubr.bf16.gmra.mxu0 %v1231
    %v1665 = vpop.f32.mrf.mxu0
    %v1666 = vadd.f32 0.0, %v1665
    %v1667 = vpop.f32.mrf.mxu0
    %v1668 = vadd.f32 0.0, %v1667
    %v1669 = vpop.f32.mrf.mxu0
    %v1670 = vadd.f32 0.0, %v1669
    %v1671 = vpop.f32.mrf.mxu0
    %v1672 = vadd.f32 0.0, %v1671
    %1673 = vmatprep.mubr.bf16.mxu0 %v1234
    %1674 = vmatmul.mubr.bf16.gmra.mxu0 %v1233
    %v1675 = vpop.f32.mrf.mxu0
    %v1676 = vadd.f32 0.0, %v1675
    %v1677 = vpop.f32.mrf.mxu0
    %v1678 = vadd.f32 0.0, %v1677
    %v1679 = vpop.f32.mrf.mxu0
    %v1680 = vadd.f32 0.0, %v1679
    %v1681 = vpop.f32.mrf.mxu0
    %v1682 = vadd.f32 0.0, %v1681
    %1683 = vmatprep.mubr.bf16.mxu0 %v1236
    %1684 = vmatmul.mubr.bf16.gmra.mxu0 %v1235
    %v1685 = vpop.f32.mrf.mxu0
    %v1686 = vadd.f32 0.0, %v1685
    %v1687 = vpop.f32.mrf.mxu0
    %v1688 = vadd.f32 0.0, %v1687
    %v1689 = vpop.f32.mrf.mxu0
    %v1690 = vadd.f32 0.0, %v1689
    %v1691 = vpop.f32.mrf.mxu0
    %v1692 = vadd.f32 0.0, %v1691
    %1693 = vmatprep.mubr.bf16.mxu0 %v1238
    %1694 = vmatmul.mubr.bf16.gmra.mxu0 %v1237
    %v1695 = vpop.f32.mrf.mxu0
    %v1696 = vadd.f32 0.0, %v1695
    %v1697 = vpop.f32.mrf.mxu0
    %v1698 = vadd.f32 0.0, %v1697
    %v1699 = vpop.f32.mrf.mxu0
    %v1700 = vadd.f32 0.0, %v1699
    %v1701 = vpop.f32.mrf.mxu0
    %v1702 = vadd.f32 0.0, %v1701
    %1703 = vmatprep.mubr.bf16.mxu0 %v1240
    %1704 = vmatmul.mubr.bf16.gmra.mxu0 %v1239
    %v1705 = vpop.f32.mrf.mxu0
    %v1706 = vadd.f32 0.0, %v1705
    %v1707 = vpop.f32.mrf.mxu0
    %v1708 = vadd.f32 0.0, %v1707
    %v1709 = vpop.f32.mrf.mxu0
    %v1710 = vadd.f32 0.0, %v1709
    %v1711 = vpop.f32.mrf.mxu0
    %v1712 = vadd.f32 0.0, %v1711
    %1713 = vmatprep.mubr.bf16.mxu0 %v1242
    %1714 = vmatmul.mubr.bf16.gmra.mxu0 %v1241
    %v1715 = vpop.f32.mrf.mxu0
    %v1716 = vadd.f32 0.0, %v1715
    %v1717 = vpop.f32.mrf.mxu0
    %v1718 = vadd.f32 0.0, %v1717
    %v1719 = vpop.f32.mrf.mxu0
    %v1720 = vadd.f32 0.0, %v1719
    %v1721 = vpop.f32.mrf.mxu0
    %v1722 = vadd.f32 0.0, %v1721
    %1723 = vmatprep.mubr.bf16.mxu0 %v1244
    %1724 = vmatmul.mubr.bf16.gmra.mxu0 %v1243
    %v1725 = vpop.f32.mrf.mxu0
    %v1726 = vadd.f32 0.0, %v1725
    %v1727 = vpop.f32.mrf.mxu0
    %v1728 = vadd.f32 0.0, %v1727
    %v1729 = vpop.f32.mrf.mxu0
    %v1730 = vadd.f32 0.0, %v1729
    %v1731 = vpop.f32.mrf.mxu0
    %v1732 = vadd.f32 0.0, %v1731
    %1733 = vmatprep.mubr.bf16.mxu0 %v1246
    %1734 = vmatmul.mubr.bf16.gmra.mxu0 %v1245
    %v1735 = vpop.f32.mrf.mxu0
    %v1736 = vadd.f32 0.0, %v1735
    %v1737 = vpop.f32.mrf.mxu0
    %v1738 = vadd.f32 0.0, %v1737
    %v1739 = vpop.f32.mrf.mxu0
    %v1740 = vadd.f32 0.0, %v1739
    %v1741 = vpop.f32.mrf.mxu0
    %v1742 = vadd.f32 0.0, %v1741
    %1743 = vdwg.mxu0
    %1744 = vmatprep.subr.bf16.mxu0 %v1534
    %1745 = vmatpush1.bf16.msra.mxu0 %v1533
    %1746 = vmatprep.subr.bf16.mxu0 %v1530
    %1747 = vmatpush1.bf16.msra.mxu0 %v1529
    %1748 = vmatprep.subr.bf16.mxu0 %v1526
    %1749 = vmatpush1.bf16.msra.mxu0 %v1525
    %1750 = vmatprep.subr.bf16.mxu0 %v1522
    %1751 = vmatpush1.bf16.msra.mxu0 %v1521
    %1752 = vmatprep.subr.bf16.mxu0 %v1518
    %1753 = vmatpush1.bf16.msra.mxu0 %v1517
    %1754 = vmatprep.subr.bf16.mxu0 %v1514
    %1755 = vmatpush1.bf16.msra.mxu0 %v1513
    %1756 = vmatprep.subr.bf16.mxu0 %v1510
    %1757 = vmatpush1.bf16.msra.mxu0 %v1509
    %1758 = vmatprep.subr.bf16.mxu0 %v1506
    %1759 = vmatpush1.bf16.msra.mxu0 %v1505
    %1760 = vmatprep.subr.bf16.mxu0 %v1566
    %1761 = vmatpush2.bf16.msra.mxu0 %v1565
    %1762 = vmatprep.subr.bf16.mxu0 %v1562
    %1763 = vmatpush2.bf16.msra.mxu0 %v1561
    %1764 = vmatprep.subr.bf16.mxu0 %v1558
    %1765 = vmatpush2.bf16.msra.mxu0 %v1557
    %1766 = vmatprep.subr.bf16.mxu0 %v1554
    %1767 = vmatpush2.bf16.msra.mxu0 %v1553
    %1768 = vmatprep.subr.bf16.mxu0 %v1550
    %1769 = vmatpush2.bf16.msra.mxu0 %v1549
    %1770 = vmatprep.subr.bf16.mxu0 %v1546
    %1771 = vmatpush2.bf16.msra.mxu0 %v1545
    %1772 = vmatprep.subr.bf16.mxu0 %v1542
    %1773 = vmatpush2.bf16.msra.mxu0 %v1541
    %1774 = vmatprep.subr.bf16.mxu0 %v1538
    %1775 = vmatpush2.bf16.msra.mxu0 %v1537
    %1776 = vmatprep.mubr.bf16.mxu0 %v1232
    %1777 = vmatmul.mubr.bf16.gmra.mxu0 %v1231
    %v1778 = vpop.f32.mrf.mxu0
    %v1779 = vadd.f32 0.0, %v1778
    %v1780 = vpop.f32.mrf.mxu0
    %v1781 = vadd.f32 0.0, %v1780
    %v1782 = vpop.f32.mrf.mxu0
    %v1783 = vadd.f32 0.0, %v1782
    %v1784 = vpop.f32.mrf.mxu0
    %v1785 = vadd.f32 0.0, %v1784
    %1786 = vmatprep.mubr.bf16.mxu0 %v1234
    %1787 = vmatmul.mubr.bf16.gmra.mxu0 %v1233
    %v1788 = vpop.f32.mrf.mxu0
    %v1789 = vadd.f32 0.0, %v1788
    %v1790 = vpop.f32.mrf.mxu0
    %v1791 = vadd.f32 0.0, %v1790
    %v1792 = vpop.f32.mrf.mxu0
    %v1793 = vadd.f32 0.0, %v1792
    %v1794 = vpop.f32.mrf.mxu0
    %v1795 = vadd.f32 0.0, %v1794
    %1796 = vmatprep.mubr.bf16.mxu0 %v1236
    %1797 = vmatmul.mubr.bf16.gmra.mxu0 %v1235
    %v1798 = vpop.f32.mrf.mxu0
    %v1799 = vadd.f32 0.0, %v1798
    %v1800 = vpop.f32.mrf.mxu0
    %v1801 = vadd.f32 0.0, %v1800
    %v1802 = vpop.f32.mrf.mxu0
    %v1803 = vadd.f32 0.0, %v1802
    %v1804 = vpop.f32.mrf.mxu0
    %v1805 = vadd.f32 0.0, %v1804
    %1806 = vmatprep.mubr.bf16.mxu0 %v1238
    %1807 = vmatmul.mubr.bf16.gmra.mxu0 %v1237
    %v1808 = vpop.f32.mrf.mxu0
    %v1809 = vadd.f32 0.0, %v1808
    %v1810 = vpop.f32.mrf.mxu0
    %v1811 = vadd.f32 0.0, %v1810
    %v1812 = vpop.f32.mrf.mxu0
    %v1813 = vadd.f32 0.0, %v1812
    %v1814 = vpop.f32.mrf.mxu0
    %v1815 = vadd.f32 0.0, %v1814
    %1816 = vmatprep.mubr.bf16.mxu0 %v1240
    %1817 = vmatmul.mubr.bf16.gmra.mxu0 %v1239
    %v1818 = vpop.f32.mrf.mxu0
    %v1819 = vadd.f32 0.0, %v1818
    %v1820 = vpop.f32.mrf.mxu0
    %v1821 = vadd.f32 0.0, %v1820
    %v1822 = vpop.f32.mrf.mxu0
    %v1823 = vadd.f32 0.0, %v1822
    %v1824 = vpop.f32.mrf.mxu0
    %v1825 = vadd.f32 0.0, %v1824
    %1826 = vmatprep.mubr.bf16.mxu0 %v1242
    %1827 = vmatmul.mubr.bf16.gmra.mxu0 %v1241
    %v1828 = vpop.f32.mrf.mxu0
    %v1829 = vadd.f32 0.0, %v1828
    %v1830 = vpop.f32.mrf.mxu0
    %v1831 = vadd.f32 0.0, %v1830
    %v1832 = vpop.f32.mrf.mxu0
    %v1833 = vadd.f32 0.0, %v1832
    %v1834 = vpop.f32.mrf.mxu0
    %v1835 = vadd.f32 0.0, %v1834
    %1836 = vmatprep.mubr.bf16.mxu0 %v1244
    %1837 = vmatmul.mubr.bf16.gmra.mxu0 %v1243
    %v1838 = vpop.f32.mrf.mxu0
    %v1839 = vadd.f32 0.0, %v1838
    %v1840 = vpop.f32.mrf.mxu0
    %v1841 = vadd.f32 0.0, %v1840
    %v1842 = vpop.f32.mrf.mxu0
    %v1843 = vadd.f32 0.0, %v1842
    %v1844 = vpop.f32.mrf.mxu0
    %v1845 = vadd.f32 0.0, %v1844
    %1846 = vmatprep.mubr.bf16.mxu0 %v1246
    %1847 = vmatmul.mubr.bf16.gmra.mxu0 %v1245
    %v1848 = vpop.f32.mrf.mxu0
    %v1849 = vadd.f32 0.0, %v1848
    %v1850 = vpop.f32.mrf.mxu0
    %v1851 = vadd.f32 0.0, %v1850
    %v1852 = vpop.f32.mrf.mxu0
    %v1853 = vadd.f32 0.0, %v1852
    %v1854 = vpop.f32.mrf.mxu0
    %v1855 = vadd.f32 0.0, %v1854
    %1856 = vdwg.mxu0
    %v1857 = vmax.f32 %v1666, 0.0
    %v1858 = vmax.f32 %v1668, 0.0
    %v1859 = vmax.f32 %v1779, 0.0
    %v1860 = vmax.f32 %v1781, 0.0
    %v1861 = vmax.f32 %v1670, 0.0
    %v1862 = vmax.f32 %v1672, 0.0
    %v1863 = vmax.f32 %v1783, 0.0
    %v1864 = vmax.f32 %v1785, 0.0
    %v1865 = vmax.f32 %v1676, 0.0
    %v1866 = vmax.f32 %v1678, 0.0
    %v1867 = vmax.f32 %v1789, 0.0
    %v1868 = vmax.f32 %v1791, 0.0
    %v1869 = vmax.f32 %v1680, 0.0
    %v1870 = vmax.f32 %v1682, 0.0
    %v1871 = vmax.f32 %v1793, 0.0
    %v1872 = vmax.f32 %v1795, 0.0
    %v1873 = vmax.f32 %v1686, 0.0
    %v1874 = vmax.f32 %v1688, 0.0
    %v1875 = vmax.f32 %v1799, 0.0
    %v1876 = vmax.f32 %v1801, 0.0
    %v1877 = vmax.f32 %v1690, 0.0
    %v1878 = vmax.f32 %v1692, 0.0
    %v1879 = vmax.f32 %v1803, 0.0
    %v1880 = vmax.f32 %v1805, 0.0
    %v1881 = vmax.f32 %v1696, 0.0
    %v1882 = vmax.f32 %v1698, 0.0
    %v1883 = vmax.f32 %v1809, 0.0
    %v1884 = vmax.f32 %v1811, 0.0
    %v1885 = vmax.f32 %v1700, 0.0
    %v1886 = vmax.f32 %v1702, 0.0
    %v1887 = vmax.f32 %v1813, 0.0
    %v1888 = vmax.f32 %v1815, 0.0
    %v1889 = vmax.f32 %v1706, 0.0
    %v1890 = vmax.f32 %v1708, 0.0
    %v1891 = vmax.f32 %v1819, 0.0
    %v1892 = vmax.f32 %v1821, 0.0
    %v1893 = vmax.f32 %v1710, 0.0
    %v1894 = vmax.f32 %v1712, 0.0
    %v1895 = vmax.f32 %v1823, 0.0
    %v1896 = vmax.f32 %v1825, 0.0
    %v1897 = vmax.f32 %v1716, 0.0
    %v1898 = vmax.f32 %v1718, 0.0
    %v1899 = vmax.f32 %v1829, 0.0
    %v1900 = vmax.f32 %v1831, 0.0
    %v1901 = vmax.f32 %v1720, 0.0
    %v1902 = vmax.f32 %v1722, 0.0
    %v1903 = vmax.f32 %v1833, 0.0
    %v1904 = vmax.f32 %v1835, 0.0
    %v1905 = vmax.f32 %v1726, 0.0
    %v1906 = vmax.f32 %v1728, 0.0
    %v1907 = vmax.f32 %v1839, 0.0
    %v1908 = vmax.f32 %v1841, 0.0
    %v1909 = vmax.f32 %v1730, 0.0
    %v1910 = vmax.f32 %v1732, 0.0
    %v1911 = vmax.f32 %v1843, 0.0
    %v1912 = vmax.f32 %v1845, 0.0
    %v1913 = vmax.f32 %v1736, 0.0
    %v1914 = vmax.f32 %v1738, 0.0
    %v1915 = vmax.f32 %v1849, 0.0
    %v1916 = vmax.f32 %v1851, 0.0
    %v1917 = vmax.f32 %v1740, 0.0
    %v1918 = vmax.f32 %v1742, 0.0
    %v1919 = vmax.f32 %v1853, 0.0
    %v1920 = vmax.f32 %v1855, 0.0
    %v1921 = vmax.f32 %v1857, %v1861
    %v1922 = vmax.f32 %v1858, %v1862
    %v1923 = vmax.f32 %v1859, %v1863
    %v1924 = vmax.f32 %v1860, %v1864
    %v1925 = vmax.f32 %v1921, %v1865
    %v1926 = vmax.f32 %v1922, %v1866
    %v1927 = vmax.f32 %v1923, %v1867
    %v1928 = vmax.f32 %v1924, %v1868
    %v1929 = vmax.f32 %v1925, %v1869
    %v1930 = vmax.f32 %v1926, %v1870
    %v1931 = vmax.f32 %v1927, %v1871
    %v1932 = vmax.f32 %v1928, %v1872
    %v1933 = vmax.f32 %v1929, %v1873
    %v1934 = vmax.f32 %v1930, %v1874
    %v1935 = vmax.f32 %v1931, %v1875
    %v1936 = vmax.f32 %v1932, %v1876
    %v1937 = vmax.f32 %v1933, %v1877
    %v1938 = vmax.f32 %v1934, %v1878
    %v1939 = vmax.f32 %v1935, %v1879
    %v1940 = vmax.f32 %v1936, %v1880
    %v1941 = vmax.f32 %v1937, %v1881
    %v1942 = vmax.f32 %v1938, %v1882
    %v1943 = vmax.f32 %v1939, %v1883
    %v1944 = vmax.f32 %v1940, %v1884
    %v1945 = vmax.f32 %v1941, %v1885
    %v1946 = vmax.f32 %v1942, %v1886
    %v1947 = vmax.f32 %v1943, %v1887
    %v1948 = vmax.f32 %v1944, %v1888
    %v1949 = vmax.f32 %v1945, %v1889
    %v1950 = vmax.f32 %v1946, %v1890
    %v1951 = vmax.f32 %v1947, %v1891
    %v1952 = vmax.f32 %v1948, %v1892
    %v1953 = vmax.f32 %v1949, %v1893
    %v1954 = vmax.f32 %v1950, %v1894
    %v1955 = vmax.f32 %v1951, %v1895
    %v1956 = vmax.f32 %v1952, %v1896
    %v1957 = vmax.f32 %v1953, %v1897
    %v1958 = vmax.f32 %v1954, %v1898
    %v1959 = vmax.f32 %v1955, %v1899
    %v1960 = vmax.f32 %v1956, %v1900
    %v1961 = vmax.f32 %v1957, %v1901
    %v1962 = vmax.f32 %v1958, %v1902
    %v1963 = vmax.f32 %v1959, %v1903
    %v1964 = vmax.f32 %v1960, %v1904
    %v1965 = vmax.f32 %v1961, %v1905
    %v1966 = vmax.f32 %v1962, %v1906
    %v1967 = vmax.f32 %v1963, %v1907
    %v1968 = vmax.f32 %v1964, %v1908
    %v1969 = vmax.f32 %v1965, %v1909
    %v1970 = vmax.f32 %v1966, %v1910
    %v1971 = vmax.f32 %v1967, %v1911
    %v1972 = vmax.f32 %v1968, %v1912
    %v1973 = vmax.f32 %v1969, %v1913
    %v1974 = vmax.f32 %v1970, %v1914
    %v1975 = vmax.f32 %v1971, %v1915
    %v1976 = vmax.f32 %v1972, %v1916
    %v1977 = vmax.f32 %v1973, %v1917
    %v1978 = vmax.f32 %v1974, %v1918
    %v1979 = vmax.f32 %v1975, %v1919
    %v1980 = vmax.f32 %v1976, %v1920
    %1981 = vst [vmem:[#allocation13 + $0x20] sm:$0xff] %v1977
    %1982 = vst [vmem:[#allocation13 + $0x28] sm:$0xff] %v1978
    %1983 = vst [vmem:[#allocation13 + $0x30] sm:$0xff] %v1979
    %1984 = vst [vmem:[#allocation13 + $0x38] sm:$0xff] %v1980
    // Predicated region
    $region50: #{tpu_custom_call.1} parent=1 // pred_check
      _
    $region51: #{tpu_custom_call.1} parent=1 // pred_check_branch
      %1986 = sbr.rel (0) target = $region53
    $region52: #{tpu_custom_call.1} parent=1 // pred_region
      %s1988 = ssub.s32 1024, 1024
      %1989 = vsyncadd [#allocation4], %s1988
      %s1991 = sshll.u32 [#allocation13], 4
      %s1992 = int_to_ptr.vmem [resolvable:$true] %s1991
      %1994 = dma.vmem_to_hbm [thread:$0]  %s1992, 1024, %s6, [#allocation4]
    $region53: #{tpu_custom_call.1} parent=1 // pred_fallthru
      _
    // Predicated region
    $region54: #{tpu_custom_call.1} parent=1 // pred_check
      _
    $region55: #{tpu_custom_call.1} parent=1 // pred_check_branch
      %1996 = sbr.rel (0) target = $region57
    $region56: #{tpu_custom_call.1} parent=1 // pred_region
      %1997 = dma.done [#allocation4], 1024
    $region57: #{tpu_custom_call.1} parent=1 // pred_fallthru
      _
    %1998 = vsyncpa [#allocation3], 1
    %1999 = vsyncpa [#allocation6], 1
    %2000 = vsyncpa [#allocation9], 1
    %2001 = vsyncpa [#allocation12], 1
    %2002 = vsyncpa [#allocation4], 1

</llo_original>
